<compile_context>
chip_gen: v5e
topology: v5e:2x2
jax: 0.10.0
libtpu: 0.0.40
codegen_flags: <defaults>
</compile_context>

<pallas_src>
import functools

import jax
import jax.numpy as jnp
from jax.experimental import pallas as pl
from jax.experimental.pallas import tpu as pltpu


def _conv_bn_relu_kernel(x_ref, w_ref, shift_ref, o_ref, frame_ref, *,
                         kh, kw, pad, w_in, wp, ho, wo, nb, relu):
    """One grid step: `nb` images, conv + folded BN + ReLU, valid region only.

    x_ref:     (nb, Cin, H*W)    original (unpadded) images, input dtype (f32)
    w_ref:     (Cout, K)         K = KH*KW*Cin, BN scale folded, bf16, resident
    shift_ref: (Cout, 1)         folded BN shift, f32, resident
    o_ref:     (nb, Cout, Ho*Wo) valid-region output, lane-dense flat spatial
    frame_ref: (Cin, Hp*Wp)      zero-padded bf16 staging frame (VMEM scratch)
    """
    cin = x_ref.shape[1]
    h_in = x_ref.shape[2] // w_in
    npv = (ho - 1) * wp + wo          # flattened stride-1 valid window length

    # Border zeroing once per grid step.  Re-done every step (not gated on
    # program_id == 0) so the grid axis can be "parallel" on megacore parts.
    if pad > 0:
        frame_ref[...] = jnp.zeros_like(frame_ref)

    for b in range(nb):
        # ---- stage the zero-padded bf16 frame for image b -------------------
        if pad == 0:
            frame_ref[...] = x_ref[b].astype(frame_ref.dtype)
        else:
            for h in range(h_in):
                dst = (h + pad) * wp + pad
                frame_ref[:, dst:dst + w_in] = (
                    x_ref[b, :, h * w_in:(h + 1) * w_in].astype(frame_ref.dtype))

        # ---- KH*KW accumulating MXU dots (bf16 in, f32 accumulate) ----------
        acc = None
        for i in range(kh):
            for j in range(kw):
                t = i * kw + j
                off = i * wp + j
                d = jnp.dot(w_ref[:, t * cin:(t + 1) * cin],       # (Cout, Cin)
                            frame_ref[:, off:off + npv],           # (Cin, Npv)
                            preferred_element_type=jnp.float32)    # (Cout, Npv)
                acc = d if acc is None else acc + d

        # ---- epilogue: folded-BN shift (+ ReLU) ------------------------------
        y = acc + shift_ref[...]
        if relu:
            y = jnp.maximum(y, 0.0)
        y = y.astype(o_ref.dtype)

        # ---- store only the valid (Ho, Wo) region (pitch Wp -> pitch Wo) -----
        for r in range(ho):
            o_ref[b, :, r * wo:(r + 1) * wo] = y[:, r * wp:r * wp + wo]


def basic_conv_ffca(
    x,                      # (N, Cin, H, W)  NCHW, like the PyTorch module
    weight,                 # (Cout, Cin, KH, KW)
    gamma, beta, running_mean, running_var,     # (Cout,) each
    *, stride=1, padding=0, eps=1e-5, relu=True, bn=True,
    images_per_step=None, compute_dtype=jnp.bfloat16,
):
    N, Cin, H, W = x.shape
    Cout, Cin_w, KH, KW = weight.shape
    assert Cin_w == Cin, "groups != 1 / dilation != 1 not supported"

    Hp, Wp = H + 2 * padding, W + 2 * padding
    assert Hp >= KH and Wp >= KW
    Ho1, Wo1 = Hp - KH + 1, Wp - KW + 1           # stride-1 valid output size
    Ho = (Hp - KH) // stride + 1
    Wo = (Wp - KW) // stride + 1
    K = KH * KW * Cin
    F = Hp * Wp

    # Images per grid step (amortize ~0.35us/step overhead, keep blocks modest).
    if images_per_step is None:
        budget = 4 << 20
        per_img = (Cin * H * W + Cout * Ho1 * Wo1) * x.dtype.itemsize
        nb = 1
        for d in range(1, min(N, 8) + 1):
            if N % d == 0 and d * per_img <= budget:
                nb = d
    else:
        nb = int(images_per_step)
        assert N % nb == 0, "images_per_step must divide the batch"

    # Fold inference BatchNorm into the weights (scale) and a bias (shift).
    if bn:
        scale = (gamma / jnp.sqrt(running_var + eps)).astype(jnp.float32)
        shift = (beta - running_mean * scale).astype(jnp.float32)
    else:
        scale = jnp.ones((Cout,), jnp.float32)
        shift = jnp.zeros((Cout,), jnp.float32)
    # (Cout, Cin, KH, KW) -> (Cout, K) with columns ordered (kh, kw, cin).
    w2 = (jnp.transpose(weight, (0, 2, 3, 1)).reshape(Cout, K).astype(jnp.float32)
          * scale[:, None]).astype(compute_dtype)
    shift2 = shift.reshape(Cout, 1)

    # Free metadata-only reshape; padding + dtype cast happen in-kernel.
    x_flat = x.reshape(N, Cin, H * W)

    kernel = functools.partial(
        _conv_bn_relu_kernel, kh=KH, kw=KW, pad=padding, w_in=W, wp=Wp,
        ho=Ho1, wo=Wo1, nb=nb, relu=relu)

    per_step_bytes = (
        2 * nb * Cin * H * W * x.dtype.itemsize           # input block, dbl-buffered
        + 2 * nb * Cout * Ho1 * Wo1 * x.dtype.itemsize    # output block, dbl-buffered
        + Cout * K * 2 + Cout * 4                         # resident weights / shift
        + Cin * F * 2)                                    # staging frame
    vmem_limit = int(min(max(2 * per_step_bytes, 8 << 20), 64 << 20))

    out = pl.pallas_call(
        kernel,
        out_shape=jax.ShapeDtypeStruct((N, Cout, Ho1 * Wo1), x.dtype),
        grid=(N // nb,),
        in_specs=[
            pl.BlockSpec((nb, Cin, H * W), lambda n: (n, 0, 0)),   # per-step images
            pl.BlockSpec((Cout, K), lambda n: (0, 0)),             # resident weights
            pl.BlockSpec((Cout, 1), lambda n: (0, 0)),             # resident shift
        ],
        out_specs=pl.BlockSpec((nb, Cout, Ho1 * Wo1), lambda n: (n, 0, 0)),
        scratch_shapes=[pltpu.VMEM((Cin, F), compute_dtype)],      # padded frame
        compiler_params=pltpu.CompilerParams(
            dimension_semantics=("parallel",),     # megacore on multi-TC parts
            vmem_limit_bytes=vmem_limit,
        ),
    )(x_flat, w2, shift2)

    # Free (contiguous) reshape to NCHW; the kernel already wrote only the
    # valid region, so there is no slice pass over the output for stride == 1.
    out = out.reshape(N, Cout, Ho1, Wo1)
    if stride > 1:
        # TODO(synk): subsample inside the kernel instead (saves s^2 work/DMA).
        out = out[:, :, :(Ho - 1) * stride + 1:stride,
                  :(Wo - 1) * stride + 1:stride]
    return out


if __name__ == "__main__":
    # BasicConv_FFCA(in_planes=4, out_planes=8, kernel_size=3, stride=1,
    #                padding=1, relu=True, bn=True, bias=False)
    in_planes, out_planes, ksize, stride, padding = 4, 8, 3, 1, 1
    N, H, W = 2, 16, 16

    key = jax.random.PRNGKey(0)
    k0, k1, k2, k3, k4, k5 = jax.random.split(key, 6)

    x = jax.random.normal(k0, (N, in_planes, H, W), dtype=jnp.float32)
    weight = 0.1 * jax.random.normal(
        k1, (out_planes, in_planes, ksize, ksize), dtype=jnp.float32)
    gamma = 1.0 + 0.1 * jax.random.normal(k2, (out_planes,), dtype=jnp.float32)
    beta = 0.1 * jax.random.normal(k3, (out_planes,), dtype=jnp.float32)
    running_mean = 0.1 * jax.random.normal(k4, (out_planes,), dtype=jnp.float32)
    running_var = jnp.abs(
        jax.random.normal(k5, (out_planes,), dtype=jnp.float32)) + 0.5

    out = basic_conv_ffca(
        x, weight, gamma, beta, running_mean, running_var,
        stride=stride, padding=padding, relu=True, bn=True)
    out = jax.block_until_ready(out)
    assert out.shape == (N, out_planes, H, W), out.shape
    assert bool(jnp.isfinite(out).all())

    # Pure-JAX f32 reference (kernel feeds the MXU bf16 -> loose tolerance).
    ref = jax.lax.conv_general_dilated(
        x, weight, window_strides=(stride, stride),
        padding=((padding, padding), (padding, padding)),
        dimension_numbers=("NCHW", "OIHW", "NCHW"))
    scale = gamma / jnp.sqrt(running_var + 1e-5)
    ref = (ref * scale[None, :, None, None]
           + (beta - running_mean * scale)[None, :, None, None])
    ref = jnp.maximum(ref, 0.0)
    max_err = float(jnp.max(jnp.abs(out - ref)))
    assert max_err < 0.1, f"max abs error vs reference: {max_err}"

    print("KERNEL_OK")
</pallas_src>

<mosaic_0001>
module attributes {stable_mosaic.version = 11 : i64} {
  func.func @_conv_bn_relu_kernel(%arg0: i32, %arg1: memref<2x4x256xf32, #tpu.memory_space<vmem>>, %arg2: memref<8x36xbf16, #tpu.memory_space<vmem>>, %arg3: memref<8x1xf32, #tpu.memory_space<vmem>>, %arg4: memref<2x8x256xf32, #tpu.memory_space<vmem>>, %arg5: memref<4x324xbf16, #tpu.memory_space<vmem>>) attributes {dimension_semantics = [#tpu.dimension_semantics<parallel>], iteration_bounds = array<i64: 1>, scalar_prefetch = 0 : i64, scratch_operands = 1 : i64, tpu.core_type = #tpu.core_type<tc>, window_params = [{transform_indices = @transform_0, window_bounds = array<i64: 2, 4, 256>}, {pipeline_mode = #tpu.pipeline_mode<synchronous>, transform_indices = @transform_1, window_bounds = array<i64: 8, 36>}, {pipeline_mode = #tpu.pipeline_mode<synchronous>, transform_indices = @transform_2, window_bounds = array<i64: 8, 1>}, {transform_indices = @transform_3, window_bounds = array<i64: 2, 8, 256>}]} {
    %cst = arith.constant 0.000000e+00 : bf16
    %0 = vector.broadcast %cst : bf16 to vector<4x324xbf16>
    %c0 = arith.constant 0 : index
    %c0_0 = arith.constant 0 : index
    %1 = vector.load %arg5[%c0, %c0_0] : memref<4x324xbf16, #tpu.memory_space<vmem>>, vector<4x324xbf16>
    tpu.vector_store %arg5[%c0, %c0_0], %0 {strides = array<i32>} : memref<4x324xbf16, #tpu.memory_space<vmem>>, vector<4x324xbf16>,
    %c0_1 = arith.constant 0 : index
    %c0_2 = arith.constant 0 : index
    %c0_3 = arith.constant 0 : index
    %2 = vector.load %arg1[%c0_1, %c0_2, %c0_3] : memref<2x4x256xf32, #tpu.memory_space<vmem>>, vector<1x4x16xf32>
    %3 = vector.shape_cast %2 : vector<1x4x16xf32> to vector<4x16xf32>
    %4 = arith.truncf %3 : vector<4x16xf32> to vector<4x16xbf16>
    %c0_4 = arith.constant 0 : index
    %c19 = arith.constant 19 : index
    %5 = vector.load %arg5[%c0_4, %c19] : memref<4x324xbf16, #tpu.memory_space<vmem>>, vector<4x16xbf16>
    tpu.vector_store %arg5[%c0_4, %c19], %4 {strides = array<i32>} : memref<4x324xbf16, #tpu.memory_space<vmem>>, vector<4x16xbf16>,
    %c0_5 = arith.constant 0 : index
    %c0_6 = arith.constant 0 : index
    %c16 = arith.constant 16 : index
    %6 = vector.load %arg1[%c0_5, %c0_6, %c16] : memref<2x4x256xf32, #tpu.memory_space<vmem>>, vector<1x4x16xf32>
    %7 = vector.shape_cast %6 : vector<1x4x16xf32> to vector<4x16xf32>
    %8 = arith.truncf %7 : vector<4x16xf32> to vector<4x16xbf16>
    %c0_7 = arith.constant 0 : index
    %c37 = arith.constant 37 : index
    %9 = vector.load %arg5[%c0_7, %c37] : memref<4x324xbf16, #tpu.memory_space<vmem>>, vector<4x16xbf16>
    tpu.vector_store %arg5[%c0_7, %c37], %8 {strides = array<i32>} : memref<4x324xbf16, #tpu.memory_space<vmem>>, vector<4x16xbf16>,
    %c0_8 = arith.constant 0 : index
    %c0_9 = arith.constant 0 : index
    %c32 = arith.constant 32 : index
    %10 = vector.load %arg1[%c0_8, %c0_9, %c32] : memref<2x4x256xf32, #tpu.memory_space<vmem>>, vector<1x4x16xf32>
    %11 = vector.shape_cast %10 : vector<1x4x16xf32> to vector<4x16xf32>
    %12 = arith.truncf %11 : vector<4x16xf32> to vector<4x16xbf16>
    %c0_10 = arith.constant 0 : index
    %c55 = arith.constant 55 : index
    %13 = vector.load %arg5[%c0_10, %c55] : memref<4x324xbf16, #tpu.memory_space<vmem>>, vector<4x16xbf16>
    tpu.vector_store %arg5[%c0_10, %c55], %12 {strides = array<i32>} : memref<4x324xbf16, #tpu.memory_space<vmem>>, vector<4x16xbf16>,
    %c0_11 = arith.constant 0 : index
    %c0_12 = arith.constant 0 : index
    %c48 = arith.constant 48 : index
    %14 = vector.load %arg1[%c0_11, %c0_12, %c48] : memref<2x4x256xf32, #tpu.memory_space<vmem>>, vector<1x4x16xf32>
    %15 = vector.shape_cast %14 : vector<1x4x16xf32> to vector<4x16xf32>
    %16 = arith.truncf %15 : vector<4x16xf32> to vector<4x16xbf16>
    %c0_13 = arith.constant 0 : index
    %c73 = arith.constant 73 : index
    %17 = vector.load %arg5[%c0_13, %c73] : memref<4x324xbf16, #tpu.memory_space<vmem>>, vector<4x16xbf16>
    tpu.vector_store %arg5[%c0_13, %c73], %16 {strides = array<i32>} : memref<4x324xbf16, #tpu.memory_space<vmem>>, vector<4x16xbf16>,
    %c0_14 = arith.constant 0 : index
    %c0_15 = arith.constant 0 : index
    %c64 = arith.constant 64 : index
    %18 = vector.load %arg1[%c0_14, %c0_15, %c64] : memref<2x4x256xf32, #tpu.memory_space<vmem>>, vector<1x4x16xf32>
    %19 = vector.shape_cast %18 : vector<1x4x16xf32> to vector<4x16xf32>
    %20 = arith.truncf %19 : vector<4x16xf32> to vector<4x16xbf16>
    %c0_16 = arith.constant 0 : index
    %c91 = arith.constant 91 : index
    %21 = vector.load %arg5[%c0_16, %c91] : memref<4x324xbf16, #tpu.memory_space<vmem>>, vector<4x16xbf16>
    tpu.vector_store %arg5[%c0_16, %c91], %20 {strides = array<i32>} : memref<4x324xbf16, #tpu.memory_space<vmem>>, vector<4x16xbf16>,
    %c0_17 = arith.constant 0 : index
    %c0_18 = arith.constant 0 : index
    %c80 = arith.constant 80 : index
    %22 = vector.load %arg1[%c0_17, %c0_18, %c80] : memref<2x4x256xf32, #tpu.memory_space<vmem>>, vector<1x4x16xf32>
    %23 = vector.shape_cast %22 : vector<1x4x16xf32> to vector<4x16xf32>
    %24 = arith.truncf %23 : vector<4x16xf32> to vector<4x16xbf16>
    %c0_19 = arith.constant 0 : index
    %c109 = arith.constant 109 : index
    %25 = vector.load %arg5[%c0_19, %c109] : memref<4x324xbf16, #tpu.memory_space<vmem>>, vector<4x16xbf16>
    tpu.vector_store %arg5[%c0_19, %c109], %24 {strides = array<i32>} : memref<4x324xbf16, #tpu.memory_space<vmem>>, vector<4x16xbf16>,
    %c0_20 = arith.constant 0 : index
    %c0_21 = arith.constant 0 : index
    %c96 = arith.constant 96 : index
    %26 = vector.load %arg1[%c0_20, %c0_21, %c96] : memref<2x4x256xf32, #tpu.memory_space<vmem>>, vector<1x4x16xf32>
    %27 = vector.shape_cast %26 : vector<1x4x16xf32> to vector<4x16xf32>
    %28 = arith.truncf %27 : vector<4x16xf32> to vector<4x16xbf16>
    %c0_22 = arith.constant 0 : index
    %c127 = arith.constant 127 : index
    %29 = vector.load %arg5[%c0_22, %c127] : memref<4x324xbf16, #tpu.memory_space<vmem>>, vector<4x16xbf16>
    tpu.vector_store %arg5[%c0_22, %c127], %28 {strides = array<i32>} : memref<4x324xbf16, #tpu.memory_space<vmem>>, vector<4x16xbf16>,
    %c0_23 = arith.constant 0 : index
    %c0_24 = arith.constant 0 : index
    %c112 = arith.constant 112 : index
    %30 = vector.load %arg1[%c0_23, %c0_24, %c112] : memref<2x4x256xf32, #tpu.memory_space<vmem>>, vector<1x4x16xf32>
    %31 = vector.shape_cast %30 : vector<1x4x16xf32> to vector<4x16xf32>
    %32 = arith.truncf %31 : vector<4x16xf32> to vector<4x16xbf16>
    %c0_25 = arith.constant 0 : index
    %c145 = arith.constant 145 : index
    %33 = vector.load %arg5[%c0_25, %c145] : memref<4x324xbf16, #tpu.memory_space<vmem>>, vector<4x16xbf16>
    tpu.vector_store %arg5[%c0_25, %c145], %32 {strides = array<i32>} : memref<4x324xbf16, #tpu.memory_space<vmem>>, vector<4x16xbf16>,
    %c0_26 = arith.constant 0 : index
    %c0_27 = arith.constant 0 : index
    %c128 = arith.constant 128 : index
    %34 = vector.load %arg1[%c0_26, %c0_27, %c128] : memref<2x4x256xf32, #tpu.memory_space<vmem>>, vector<1x4x16xf32>
    %35 = vector.shape_cast %34 : vector<1x4x16xf32> to vector<4x16xf32>
    %36 = arith.truncf %35 : vector<4x16xf32> to vector<4x16xbf16>
    %c0_28 = arith.constant 0 : index
    %c163 = arith.constant 163 : index
    %37 = vector.load %arg5[%c0_28, %c163] : memref<4x324xbf16, #tpu.memory_space<vmem>>, vector<4x16xbf16>
    tpu.vector_store %arg5[%c0_28, %c163], %36 {strides = array<i32>} : memref<4x324xbf16, #tpu.memory_space<vmem>>, vector<4x16xbf16>,
    %c0_29 = arith.constant 0 : index
    %c0_30 = arith.constant 0 : index
    %c144 = arith.constant 144 : index
    %38 = vector.load %arg1[%c0_29, %c0_30, %c144] : memref<2x4x256xf32, #tpu.memory_space<vmem>>, vector<1x4x16xf32>
    %39 = vector.shape_cast %38 : vector<1x4x16xf32> to vector<4x16xf32>
    %40 = arith.truncf %39 : vector<4x16xf32> to vector<4x16xbf16>
    %c0_31 = arith.constant 0 : index
    %c181 = arith.constant 181 : index
    %41 = vector.load %arg5[%c0_31, %c181] : memref<4x324xbf16, #tpu.memory_space<vmem>>, vector<4x16xbf16>
    tpu.vector_store %arg5[%c0_31, %c181], %40 {strides = array<i32>} : memref<4x324xbf16, #tpu.memory_space<vmem>>, vector<4x16xbf16>,
    %c0_32 = arith.constant 0 : index
    %c0_33 = arith.constant 0 : index
    %c160 = arith.constant 160 : index
    %42 = vector.load %arg1[%c0_32, %c0_33, %c160] : memref<2x4x256xf32, #tpu.memory_space<vmem>>, vector<1x4x16xf32>
    %43 = vector.shape_cast %42 : vector<1x4x16xf32> to vector<4x16xf32>
    %44 = arith.truncf %43 : vector<4x16xf32> to vector<4x16xbf16>
    %c0_34 = arith.constant 0 : index
    %c199 = arith.constant 199 : index
    %45 = vector.load %arg5[%c0_34, %c199] : memref<4x324xbf16, #tpu.memory_space<vmem>>, vector<4x16xbf16>
    tpu.vector_store %arg5[%c0_34, %c199], %44 {strides = array<i32>} : memref<4x324xbf16, #tpu.memory_space<vmem>>, vector<4x16xbf16>,
    %c0_35 = arith.constant 0 : index
    %c0_36 = arith.constant 0 : index
    %c176 = arith.constant 176 : index
    %46 = vector.load %arg1[%c0_35, %c0_36, %c176] : memref<2x4x256xf32, #tpu.memory_space<vmem>>, vector<1x4x16xf32>
    %47 = vector.shape_cast %46 : vector<1x4x16xf32> to vector<4x16xf32>
    %48 = arith.truncf %47 : vector<4x16xf32> to vector<4x16xbf16>
    %c0_37 = arith.constant 0 : index
    %c217 = arith.constant 217 : index
    %49 = vector.load %arg5[%c0_37, %c217] : memref<4x324xbf16, #tpu.memory_space<vmem>>, vector<4x16xbf16>
    tpu.vector_store %arg5[%c0_37, %c217], %48 {strides = array<i32>} : memref<4x324xbf16, #tpu.memory_space<vmem>>, vector<4x16xbf16>,
    %c0_38 = arith.constant 0 : index
    %c0_39 = arith.constant 0 : index
    %c192 = arith.constant 192 : index
    %50 = vector.load %arg1[%c0_38, %c0_39, %c192] : memref<2x4x256xf32, #tpu.memory_space<vmem>>, vector<1x4x16xf32>
    %51 = vector.shape_cast %50 : vector<1x4x16xf32> to vector<4x16xf32>
    %52 = arith.truncf %51 : vector<4x16xf32> to vector<4x16xbf16>
    %c0_40 = arith.constant 0 : index
    %c235 = arith.constant 235 : index
    %53 = vector.load %arg5[%c0_40, %c235] : memref<4x324xbf16, #tpu.memory_space<vmem>>, vector<4x16xbf16>
    tpu.vector_store %arg5[%c0_40, %c235], %52 {strides = array<i32>} : memref<4x324xbf16, #tpu.memory_space<vmem>>, vector<4x16xbf16>,
    %c0_41 = arith.constant 0 : index
    %c0_42 = arith.constant 0 : index
    %c208 = arith.constant 208 : index
    %54 = vector.load %arg1[%c0_41, %c0_42, %c208] : memref<2x4x256xf32, #tpu.memory_space<vmem>>, vector<1x4x16xf32>
    %55 = vector.shape_cast %54 : vector<1x4x16xf32> to vector<4x16xf32>
    %56 = arith.truncf %55 : vector<4x16xf32> to vector<4x16xbf16>
    %c0_43 = arith.constant 0 : index
    %c253 = arith.constant 253 : index
    %57 = vector.load %arg5[%c0_43, %c253] : memref<4x324xbf16, #tpu.memory_space<vmem>>, vector<4x16xbf16>
    tpu.vector_store %arg5[%c0_43, %c253], %56 {strides = array<i32>} : memref<4x324xbf16, #tpu.memory_space<vmem>>, vector<4x16xbf16>,
    %c0_44 = arith.constant 0 : index
    %c0_45 = arith.constant 0 : index
    %c224 = arith.constant 224 : index
    %58 = vector.load %arg1[%c0_44, %c0_45, %c224] : memref<2x4x256xf32, #tpu.memory_space<vmem>>, vector<1x4x16xf32>
    %59 = vector.shape_cast %58 : vector<1x4x16xf32> to vector<4x16xf32>
    %60 = arith.truncf %59 : vector<4x16xf32> to vector<4x16xbf16>
    %c0_46 = arith.constant 0 : index
    %c271 = arith.constant 271 : index
    %61 = vector.load %arg5[%c0_46, %c271] : memref<4x324xbf16, #tpu.memory_space<vmem>>, vector<4x16xbf16>
    tpu.vector_store %arg5[%c0_46, %c271], %60 {strides = array<i32>} : memref<4x324xbf16, #tpu.memory_space<vmem>>, vector<4x16xbf16>,
    %c0_47 = arith.constant 0 : index
    %c0_48 = arith.constant 0 : index
    %c240 = arith.constant 240 : index
    %62 = vector.load %arg1[%c0_47, %c0_48, %c240] : memref<2x4x256xf32, #tpu.memory_space<vmem>>, vector<1x4x16xf32>
    %63 = vector.shape_cast %62 : vector<1x4x16xf32> to vector<4x16xf32>
    %64 = arith.truncf %63 : vector<4x16xf32> to vector<4x16xbf16>
    %c0_49 = arith.constant 0 : index
    %c289 = arith.constant 289 : index
    %65 = vector.load %arg5[%c0_49, %c289] : memref<4x324xbf16, #tpu.memory_space<vmem>>, vector<4x16xbf16>
    tpu.vector_store %arg5[%c0_49, %c289], %64 {strides = array<i32>} : memref<4x324xbf16, #tpu.memory_space<vmem>>, vector<4x16xbf16>,
    %c0_50 = arith.constant 0 : index
    %c0_51 = arith.constant 0 : index
    %66 = vector.load %arg2[%c0_50, %c0_51] : memref<8x36xbf16, #tpu.memory_space<vmem>>, vector<8x4xbf16>
    %c0_52 = arith.constant 0 : index
    %c0_53 = arith.constant 0 : index
    %67 = vector.load %arg5[%c0_52, %c0_53] : memref<4x324xbf16, #tpu.memory_space<vmem>>, vector<4x286xbf16>
    %cst_54 = arith.constant dense<0.000000e+00> : vector<8x286xf32>
    %68 = tpu.matmul %66, %67, %cst_54 {dimension_numbers = #tpu.dot_dimension_numbers<[1], [0], [0], [1], [0, 0, 1, 1], [], []>} : vector<8x4xbf16>, vector<4x286xbf16>, vector<8x286xf32> -> vector<8x286xf32>
    %c0_55 = arith.constant 0 : index
    %c4 = arith.constant 4 : index
    %69 = vector.load %arg2[%c0_55, %c4] : memref<8x36xbf16, #tpu.memory_space<vmem>>, vector<8x4xbf16>
    %c0_56 = arith.constant 0 : index
    %c1 = arith.constant 1 : index
    %70 = vector.load %arg5[%c0_56, %c1] : memref<4x324xbf16, #tpu.memory_space<vmem>>, vector<4x286xbf16>
    %cst_57 = arith.constant dense<0.000000e+00> : vector<8x286xf32>
    %71 = tpu.matmul %69, %70, %cst_57 {dimension_numbers = #tpu.dot_dimension_numbers<[1], [0], [0], [1], [0, 0, 1, 1], [], []>} : vector<8x4xbf16>, vector<4x286xbf16>, vector<8x286xf32> -> vector<8x286xf32>
    %72 = arith.addf %68, %71 : vector<8x286xf32>
    %c0_58 = arith.constant 0 : index
    %c8 = arith.constant 8 : index
    %73 = vector.load %arg2[%c0_58, %c8] : memref<8x36xbf16, #tpu.memory_space<vmem>>, vector<8x4xbf16>
    %c0_59 = arith.constant 0 : index
    %c2 = arith.constant 2 : index
    %74 = vector.load %arg5[%c0_59, %c2] : memref<4x324xbf16, #tpu.memory_space<vmem>>, vector<4x286xbf16>
    %cst_60 = arith.constant dense<0.000000e+00> : vector<8x286xf32>
    %75 = tpu.matmul %73, %74, %cst_60 {dimension_numbers = #tpu.dot_dimension_numbers<[1], [0], [0], [1], [0, 0, 1, 1], [], []>} : vector<8x4xbf16>, vector<4x286xbf16>, vector<8x286xf32> -> vector<8x286xf32>
    %76 = arith.addf %72, %75 : vector<8x286xf32>
    %c0_61 = arith.constant 0 : index
    %c12 = arith.constant 12 : index
    %77 = vector.load %arg2[%c0_61, %c12] : memref<8x36xbf16, #tpu.memory_space<vmem>>, vector<8x4xbf16>
    %c0_62 = arith.constant 0 : index
    %c18 = arith.constant 18 : index
    %78 = vector.load %arg5[%c0_62, %c18] : memref<4x324xbf16, #tpu.memory_space<vmem>>, vector<4x286xbf16>
    %cst_63 = arith.constant dense<0.000000e+00> : vector<8x286xf32>
    %79 = tpu.matmul %77, %78, %cst_63 {dimension_numbers = #tpu.dot_dimension_numbers<[1], [0], [0], [1], [0, 0, 1, 1], [], []>} : vector<8x4xbf16>, vector<4x286xbf16>, vector<8x286xf32> -> vector<8x286xf32>
    %80 = arith.addf %76, %79 : vector<8x286xf32>
    %c0_64 = arith.constant 0 : index
    %c16_65 = arith.constant 16 : index
    %81 = vector.load %arg2[%c0_64, %c16_65] : memref<8x36xbf16, #tpu.memory_space<vmem>>, vector<8x4xbf16>
    %c0_66 = arith.constant 0 : index
    %c19_67 = arith.constant 19 : index
    %82 = vector.load %arg5[%c0_66, %c19_67] : memref<4x324xbf16, #tpu.memory_space<vmem>>, vector<4x286xbf16>
    %cst_68 = arith.constant dense<0.000000e+00> : vector<8x286xf32>
    %83 = tpu.matmul %81, %82, %cst_68 {dimension_numbers = #tpu.dot_dimension_numbers<[1], [0], [0], [1], [0, 0, 1, 1], [], []>} : vector<8x4xbf16>, vector<4x286xbf16>, vector<8x286xf32> -> vector<8x286xf32>
    %84 = arith.addf %80, %83 : vector<8x286xf32>
    %c0_69 = arith.constant 0 : index
    %c20 = arith.constant 20 : index
    %85 = vector.load %arg2[%c0_69, %c20] : memref<8x36xbf16, #tpu.memory_space<vmem>>, vector<8x4xbf16>
    %c0_70 = arith.constant 0 : index
    %c20_71 = arith.constant 20 : index
    %86 = vector.load %arg5[%c0_70, %c20_71] : memref<4x324xbf16, #tpu.memory_space<vmem>>, vector<4x286xbf16>
    %cst_72 = arith.constant dense<0.000000e+00> : vector<8x286xf32>
    %87 = tpu.matmul %85, %86, %cst_72 {dimension_numbers = #tpu.dot_dimension_numbers<[1], [0], [0], [1], [0, 0, 1, 1], [], []>} : vector<8x4xbf16>, vector<4x286xbf16>, vector<8x286xf32> -> vector<8x286xf32>
    %88 = arith.addf %84, %87 : vector<8x286xf32>
    %c0_73 = arith.constant 0 : index
    %c24 = arith.constant 24 : index
    %89 = vector.load %arg2[%c0_73, %c24] : memref<8x36xbf16, #tpu.memory_space<vmem>>, vector<8x4xbf16>
    %c0_74 = arith.constant 0 : index
    %c36 = arith.constant 36 : index
    %90 = vector.load %arg5[%c0_74, %c36] : memref<4x324xbf16, #tpu.memory_space<vmem>>, vector<4x286xbf16>
    %cst_75 = arith.constant dense<0.000000e+00> : vector<8x286xf32>
    %91 = tpu.matmul %89, %90, %cst_75 {dimension_numbers = #tpu.dot_dimension_numbers<[1], [0], [0], [1], [0, 0, 1, 1], [], []>} : vector<8x4xbf16>, vector<4x286xbf16>, vector<8x286xf32> -> vector<8x286xf32>
    %92 = arith.addf %88, %91 : vector<8x286xf32>
    %c0_76 = arith.constant 0 : index
    %c28 = arith.constant 28 : index
    %93 = vector.load %arg2[%c0_76, %c28] : memref<8x36xbf16, #tpu.memory_space<vmem>>, vector<8x4xbf16>
    %c0_77 = arith.constant 0 : index
    %c37_78 = arith.constant 37 : index
    %94 = vector.load %arg5[%c0_77, %c37_78] : memref<4x324xbf16, #tpu.memory_space<vmem>>, vector<4x286xbf16>
    %cst_79 = arith.constant dense<0.000000e+00> : vector<8x286xf32>
    %95 = tpu.matmul %93, %94, %cst_79 {dimension_numbers = #tpu.dot_dimension_numbers<[1], [0], [0], [1], [0, 0, 1, 1], [], []>} : vector<8x4xbf16>, vector<4x286xbf16>, vector<8x286xf32> -> vector<8x286xf32>
    %96 = arith.addf %92, %95 : vector<8x286xf32>
    %c0_80 = arith.constant 0 : index
    %c32_81 = arith.constant 32 : index
    %97 = vector.load %arg2[%c0_80, %c32_81] : memref<8x36xbf16, #tpu.memory_space<vmem>>, vector<8x4xbf16>
    %c0_82 = arith.constant 0 : index
    %c38 = arith.constant 38 : index
    %98 = vector.load %arg5[%c0_82, %c38] : memref<4x324xbf16, #tpu.memory_space<vmem>>, vector<4x286xbf16>
    %cst_83 = arith.constant dense<0.000000e+00> : vector<8x286xf32>
    %99 = tpu.matmul %97, %98, %cst_83 {dimension_numbers = #tpu.dot_dimension_numbers<[1], [0], [0], [1], [0, 0, 1, 1], [], []>} : vector<8x4xbf16>, vector<4x286xbf16>, vector<8x286xf32> -> vector<8x286xf32>
    %100 = arith.addf %96, %99 : vector<8x286xf32>
    %c0_84 = arith.constant 0 : index
    %c0_85 = arith.constant 0 : index
    %101 = vector.load %arg3[%c0_84, %c0_85] : memref<8x1xf32, #tpu.memory_space<vmem>>, vector<8x1xf32>
    %102 = vector.broadcast %101 : vector<8x1xf32> to vector<8x286xf32>
    %103 = arith.addf %100, %102 : vector<8x286xf32>
    %cst_86 = arith.constant 0.000000e+00 : f32
    %104 = vector.broadcast %cst_86 : f32 to vector<8x286xf32>
    %105 = arith.maximumf %103, %104 : vector<8x286xf32>
    %106 = vector.extract_strided_slice %105 {offsets = [0, 0], sizes = [8, 16], strides = [1, 1]} : vector<8x286xf32> to vector<8x16xf32>
    %c0_87 = arith.constant 0 : index
    %c0_88 = arith.constant 0 : index
    %c0_89 = arith.constant 0 : index
    %107 = vector.load %arg4[%c0_87, %c0_88, %c0_89] : memref<2x8x256xf32, #tpu.memory_space<vmem>>, vector<1x8x16xf32>
    %108 = vector.shape_cast %107 : vector<1x8x16xf32> to vector<8x16xf32>
    %109 = vector.shape_cast %106 : vector<8x16xf32> to vector<1x8x16xf32>
    tpu.vector_store %arg4[%c0_87, %c0_88, %c0_89], %109 {strides = array<i32>} : memref<2x8x256xf32, #tpu.memory_space<vmem>>, vector<1x8x16xf32>,
    %110 = vector.extract_strided_slice %105 {offsets = [0, 18], sizes = [8, 16], strides = [1, 1]} : vector<8x286xf32> to vector<8x16xf32>
    %c0_90 = arith.constant 0 : index
    %c0_91 = arith.constant 0 : index
    %c16_92 = arith.constant 16 : index
    %111 = vector.load %arg4[%c0_90, %c0_91, %c16_92] : memref<2x8x256xf32, #tpu.memory_space<vmem>>, vector<1x8x16xf32>
    %112 = vector.shape_cast %111 : vector<1x8x16xf32> to vector<8x16xf32>
    %113 = vector.shape_cast %110 : vector<8x16xf32> to vector<1x8x16xf32>
    tpu.vector_store %arg4[%c0_90, %c0_91, %c16_92], %113 {strides = array<i32>} : memref<2x8x256xf32, #tpu.memory_space<vmem>>, vector<1x8x16xf32>,
    %114 = vector.extract_strided_slice %105 {offsets = [0, 36], sizes = [8, 16], strides = [1, 1]} : vector<8x286xf32> to vector<8x16xf32>
    %c0_93 = arith.constant 0 : index
    %c0_94 = arith.constant 0 : index
    %c32_95 = arith.constant 32 : index
    %115 = vector.load %arg4[%c0_93, %c0_94, %c32_95] : memref<2x8x256xf32, #tpu.memory_space<vmem>>, vector<1x8x16xf32>
    %116 = vector.shape_cast %115 : vector<1x8x16xf32> to vector<8x16xf32>
    %117 = vector.shape_cast %114 : vector<8x16xf32> to vector<1x8x16xf32>
    tpu.vector_store %arg4[%c0_93, %c0_94, %c32_95], %117 {strides = array<i32>} : memref<2x8x256xf32, #tpu.memory_space<vmem>>, vector<1x8x16xf32>,
    %118 = vector.extract_strided_slice %105 {offsets = [0, 54], sizes = [8, 16], strides = [1, 1]} : vector<8x286xf32> to vector<8x16xf32>
    %c0_96 = arith.constant 0 : index
    %c0_97 = arith.constant 0 : index
    %c48_98 = arith.constant 48 : index
    %119 = vector.load %arg4[%c0_96, %c0_97, %c48_98] : memref<2x8x256xf32, #tpu.memory_space<vmem>>, vector<1x8x16xf32>
    %120 = vector.shape_cast %119 : vector<1x8x16xf32> to vector<8x16xf32>
    %121 = vector.shape_cast %118 : vector<8x16xf32> to vector<1x8x16xf32>
    tpu.vector_store %arg4[%c0_96, %c0_97, %c48_98], %121 {strides = array<i32>} : memref<2x8x256xf32, #tpu.memory_space<vmem>>, vector<1x8x16xf32>,
    %122 = vector.extract_strided_slice %105 {offsets = [0, 72], sizes = [8, 16], strides = [1, 1]} : vector<8x286xf32> to vector<8x16xf32>
    %c0_99 = arith.constant 0 : index
    %c0_100 = arith.constant 0 : index
    %c64_101 = arith.constant 64 : index
    %123 = vector.load %arg4[%c0_99, %c0_100, %c64_101] : memref<2x8x256xf32, #tpu.memory_space<vmem>>, vector<1x8x16xf32>
    %124 = vector.shape_cast %123 : vector<1x8x16xf32> to vector<8x16xf32>
    %125 = vector.shape_cast %122 : vector<8x16xf32> to vector<1x8x16xf32>
    tpu.vector_store %arg4[%c0_99, %c0_100, %c64_101], %125 {strides = array<i32>} : memref<2x8x256xf32, #tpu.memory_space<vmem>>, vector<1x8x16xf32>,
    %126 = vector.extract_strided_slice %105 {offsets = [0, 90], sizes = [8, 16], strides = [1, 1]} : vector<8x286xf32> to vector<8x16xf32>
    %c0_102 = arith.constant 0 : index
    %c0_103 = arith.constant 0 : index
    %c80_104 = arith.constant 80 : index
    %127 = vector.load %arg4[%c0_102, %c0_103, %c80_104] : memref<2x8x256xf32, #tpu.memory_space<vmem>>, vector<1x8x16xf32>
    %128 = vector.shape_cast %127 : vector<1x8x16xf32> to vector<8x16xf32>
    %129 = vector.shape_cast %126 : vector<8x16xf32> to vector<1x8x16xf32>
    tpu.vector_store %arg4[%c0_102, %c0_103, %c80_104], %129 {strides = array<i32>} : memref<2x8x256xf32, #tpu.memory_space<vmem>>, vector<1x8x16xf32>,
    %130 = vector.extract_strided_slice %105 {offsets = [0, 108], sizes = [8, 16], strides = [1, 1]} : vector<8x286xf32> to vector<8x16xf32>
    %c0_105 = arith.constant 0 : index
    %c0_106 = arith.constant 0 : index
    %c96_107 = arith.constant 96 : index
    %131 = vector.load %arg4[%c0_105, %c0_106, %c96_107] : memref<2x8x256xf32, #tpu.memory_space<vmem>>, vector<1x8x16xf32>
    %132 = vector.shape_cast %131 : vector<1x8x16xf32> to vector<8x16xf32>
    %133 = vector.shape_cast %130 : vector<8x16xf32> to vector<1x8x16xf32>
    tpu.vector_store %arg4[%c0_105, %c0_106, %c96_107], %133 {strides = array<i32>} : memref<2x8x256xf32, #tpu.memory_space<vmem>>, vector<1x8x16xf32>,
    %134 = vector.extract_strided_slice %105 {offsets = [0, 126], sizes = [8, 16], strides = [1, 1]} : vector<8x286xf32> to vector<8x16xf32>
    %c0_108 = arith.constant 0 : index
    %c0_109 = arith.constant 0 : index
    %c112_110 = arith.constant 112 : index
    %135 = vector.load %arg4[%c0_108, %c0_109, %c112_110] : memref<2x8x256xf32, #tpu.memory_space<vmem>>, vector<1x8x16xf32>
    %136 = vector.shape_cast %135 : vector<1x8x16xf32> to vector<8x16xf32>
    %137 = vector.shape_cast %134 : vector<8x16xf32> to vector<1x8x16xf32>
    tpu.vector_store %arg4[%c0_108, %c0_109, %c112_110], %137 {strides = array<i32>} : memref<2x8x256xf32, #tpu.memory_space<vmem>>, vector<1x8x16xf32>,
    %138 = vector.extract_strided_slice %105 {offsets = [0, 144], sizes = [8, 16], strides = [1, 1]} : vector<8x286xf32> to vector<8x16xf32>
    %c0_111 = arith.constant 0 : index
    %c0_112 = arith.constant 0 : index
    %c128_113 = arith.constant 128 : index
    %139 = vector.load %arg4[%c0_111, %c0_112, %c128_113] : memref<2x8x256xf32, #tpu.memory_space<vmem>>, vector<1x8x16xf32>
    %140 = vector.shape_cast %139 : vector<1x8x16xf32> to vector<8x16xf32>
    %141 = vector.shape_cast %138 : vector<8x16xf32> to vector<1x8x16xf32>
    tpu.vector_store %arg4[%c0_111, %c0_112, %c128_113], %141 {strides = array<i32>} : memref<2x8x256xf32, #tpu.memory_space<vmem>>, vector<1x8x16xf32>,
    %142 = vector.extract_strided_slice %105 {offsets = [0, 162], sizes = [8, 16], strides = [1, 1]} : vector<8x286xf32> to vector<8x16xf32>
    %c0_114 = arith.constant 0 : index
    %c0_115 = arith.constant 0 : index
    %c144_116 = arith.constant 144 : index
    %143 = vector.load %arg4[%c0_114, %c0_115, %c144_116] : memref<2x8x256xf32, #tpu.memory_space<vmem>>, vector<1x8x16xf32>
    %144 = vector.shape_cast %143 : vector<1x8x16xf32> to vector<8x16xf32>
    %145 = vector.shape_cast %142 : vector<8x16xf32> to vector<1x8x16xf32>
    tpu.vector_store %arg4[%c0_114, %c0_115, %c144_116], %145 {strides = array<i32>} : memref<2x8x256xf32, #tpu.memory_space<vmem>>, vector<1x8x16xf32>,
    %146 = vector.extract_strided_slice %105 {offsets = [0, 180], sizes = [8, 16], strides = [1, 1]} : vector<8x286xf32> to vector<8x16xf32>
    %c0_117 = arith.constant 0 : index
    %c0_118 = arith.constant 0 : index
    %c160_119 = arith.constant 160 : index
    %147 = vector.load %arg4[%c0_117, %c0_118, %c160_119] : memref<2x8x256xf32, #tpu.memory_space<vmem>>, vector<1x8x16xf32>
    %148 = vector.shape_cast %147 : vector<1x8x16xf32> to vector<8x16xf32>
    %149 = vector.shape_cast %146 : vector<8x16xf32> to vector<1x8x16xf32>
    tpu.vector_store %arg4[%c0_117, %c0_118, %c160_119], %149 {strides = array<i32>} : memref<2x8x256xf32, #tpu.memory_space<vmem>>, vector<1x8x16xf32>,
    %150 = vector.extract_strided_slice %105 {offsets = [0, 198], sizes = [8, 16], strides = [1, 1]} : vector<8x286xf32> to vector<8x16xf32>
    %c0_120 = arith.constant 0 : index
    %c0_121 = arith.constant 0 : index
    %c176_122 = arith.constant 176 : index
    %151 = vector.load %arg4[%c0_120, %c0_121, %c176_122] : memref<2x8x256xf32, #tpu.memory_space<vmem>>, vector<1x8x16xf32>
    %152 = vector.shape_cast %151 : vector<1x8x16xf32> to vector<8x16xf32>
    %153 = vector.shape_cast %150 : vector<8x16xf32> to vector<1x8x16xf32>
    tpu.vector_store %arg4[%c0_120, %c0_121, %c176_122], %153 {strides = array<i32>} : memref<2x8x256xf32, #tpu.memory_space<vmem>>, vector<1x8x16xf32>,
    %154 = vector.extract_strided_slice %105 {offsets = [0, 216], sizes = [8, 16], strides = [1, 1]} : vector<8x286xf32> to vector<8x16xf32>
    %c0_123 = arith.constant 0 : index
    %c0_124 = arith.constant 0 : index
    %c192_125 = arith.constant 192 : index
    %155 = vector.load %arg4[%c0_123, %c0_124, %c192_125] : memref<2x8x256xf32, #tpu.memory_space<vmem>>, vector<1x8x16xf32>
    %156 = vector.shape_cast %155 : vector<1x8x16xf32> to vector<8x16xf32>
    %157 = vector.shape_cast %154 : vector<8x16xf32> to vector<1x8x16xf32>
    tpu.vector_store %arg4[%c0_123, %c0_124, %c192_125], %157 {strides = array<i32>} : memref<2x8x256xf32, #tpu.memory_space<vmem>>, vector<1x8x16xf32>,
    %158 = vector.extract_strided_slice %105 {offsets = [0, 234], sizes = [8, 16], strides = [1, 1]} : vector<8x286xf32> to vector<8x16xf32>
    %c0_126 = arith.constant 0 : index
    %c0_127 = arith.constant 0 : index
    %c208_128 = arith.constant 208 : index
    %159 = vector.load %arg4[%c0_126, %c0_127, %c208_128] : memref<2x8x256xf32, #tpu.memory_space<vmem>>, vector<1x8x16xf32>
    %160 = vector.shape_cast %159 : vector<1x8x16xf32> to vector<8x16xf32>
    %161 = vector.shape_cast %158 : vector<8x16xf32> to vector<1x8x16xf32>
    tpu.vector_store %arg4[%c0_126, %c0_127, %c208_128], %161 {strides = array<i32>} : memref<2x8x256xf32, #tpu.memory_space<vmem>>, vector<1x8x16xf32>,
    %162 = vector.extract_strided_slice %105 {offsets = [0, 252], sizes = [8, 16], strides = [1, 1]} : vector<8x286xf32> to vector<8x16xf32>
    %c0_129 = arith.constant 0 : index
    %c0_130 = arith.constant 0 : index
    %c224_131 = arith.constant 224 : index
    %163 = vector.load %arg4[%c0_129, %c0_130, %c224_131] : memref<2x8x256xf32, #tpu.memory_space<vmem>>, vector<1x8x16xf32>
    %164 = vector.shape_cast %163 : vector<1x8x16xf32> to vector<8x16xf32>
    %165 = vector.shape_cast %162 : vector<8x16xf32> to vector<1x8x16xf32>
    tpu.vector_store %arg4[%c0_129, %c0_130, %c224_131], %165 {strides = array<i32>} : memref<2x8x256xf32, #tpu.memory_space<vmem>>, vector<1x8x16xf32>,
    %166 = vector.extract_strided_slice %105 {offsets = [0, 270], sizes = [8, 16], strides = [1, 1]} : vector<8x286xf32> to vector<8x16xf32>
    %c0_132 = arith.constant 0 : index
    %c0_133 = arith.constant 0 : index
    %c240_134 = arith.constant 240 : index
    %167 = vector.load %arg4[%c0_132, %c0_133, %c240_134] : memref<2x8x256xf32, #tpu.memory_space<vmem>>, vector<1x8x16xf32>
    %168 = vector.shape_cast %167 : vector<1x8x16xf32> to vector<8x16xf32>
    %169 = vector.shape_cast %166 : vector<8x16xf32> to vector<1x8x16xf32>
    tpu.vector_store %arg4[%c0_132, %c0_133, %c240_134], %169 {strides = array<i32>} : memref<2x8x256xf32, #tpu.memory_space<vmem>>, vector<1x8x16xf32>,
    %c1_135 = arith.constant 1 : index
    %c0_136 = arith.constant 0 : index
    %c0_137 = arith.constant 0 : index
    %170 = vector.load %arg1[%c1_135, %c0_136, %c0_137] : memref<2x4x256xf32, #tpu.memory_space<vmem>>, vector<1x4x16xf32>
    %171 = vector.shape_cast %170 : vector<1x4x16xf32> to vector<4x16xf32>
    %172 = arith.truncf %171 : vector<4x16xf32> to vector<4x16xbf16>
    %c0_138 = arith.constant 0 : index
    %c19_139 = arith.constant 19 : index
    %173 = vector.load %arg5[%c0_138, %c19_139] : memref<4x324xbf16, #tpu.memory_space<vmem>>, vector<4x16xbf16>
    tpu.vector_store %arg5[%c0_138, %c19_139], %172 {strides = array<i32>} : memref<4x324xbf16, #tpu.memory_space<vmem>>, vector<4x16xbf16>,
    %c1_140 = arith.constant 1 : index
    %c0_141 = arith.constant 0 : index
    %c16_142 = arith.constant 16 : index
    %174 = vector.load %arg1[%c1_140, %c0_141, %c16_142] : memref<2x4x256xf32, #tpu.memory_space<vmem>>, vector<1x4x16xf32>
    %175 = vector.shape_cast %174 : vector<1x4x16xf32> to vector<4x16xf32>
    %176 = arith.truncf %175 : vector<4x16xf32> to vector<4x16xbf16>
    %c0_143 = arith.constant 0 : index
    %c37_144 = arith.constant 37 : index
    %177 = vector.load %arg5[%c0_143, %c37_144] : memref<4x324xbf16, #tpu.memory_space<vmem>>, vector<4x16xbf16>
    tpu.vector_store %arg5[%c0_143, %c37_144], %176 {strides = array<i32>} : memref<4x324xbf16, #tpu.memory_space<vmem>>, vector<4x16xbf16>,
    %c1_145 = arith.constant 1 : index
    %c0_146 = arith.constant 0 : index
    %c32_147 = arith.constant 32 : index
    %178 = vector.load %arg1[%c1_145, %c0_146, %c32_147] : memref<2x4x256xf32, #tpu.memory_space<vmem>>, vector<1x4x16xf32>
    %179 = vector.shape_cast %178 : vector<1x4x16xf32> to vector<4x16xf32>
    %180 = arith.truncf %179 : vector<4x16xf32> to vector<4x16xbf16>
    %c0_148 = arith.constant 0 : index
    %c55_149 = arith.constant 55 : index
    %181 = vector.load %arg5[%c0_148, %c55_149] : memref<4x324xbf16, #tpu.memory_space<vmem>>, vector<4x16xbf16>
    tpu.vector_store %arg5[%c0_148, %c55_149], %180 {strides = array<i32>} : memref<4x324xbf16, #tpu.memory_space<vmem>>, vector<4x16xbf16>,
    %c1_150 = arith.constant 1 : index
    %c0_151 = arith.constant 0 : index
    %c48_152 = arith.constant 48 : index
    %182 = vector.load %arg1[%c1_150, %c0_151, %c48_152] : memref<2x4x256xf32, #tpu.memory_space<vmem>>, vector<1x4x16xf32>
    %183 = vector.shape_cast %182 : vector<1x4x16xf32> to vector<4x16xf32>
    %184 = arith.truncf %183 : vector<4x16xf32> to vector<4x16xbf16>
    %c0_153 = arith.constant 0 : index
    %c73_154 = arith.constant 73 : index
    %185 = vector.load %arg5[%c0_153, %c73_154] : memref<4x324xbf16, #tpu.memory_space<vmem>>, vector<4x16xbf16>
    tpu.vector_store %arg5[%c0_153, %c73_154], %184 {strides = array<i32>} : memref<4x324xbf16, #tpu.memory_space<vmem>>, vector<4x16xbf16>,
    %c1_155 = arith.constant 1 : index
    %c0_156 = arith.constant 0 : index
    %c64_157 = arith.constant 64 : index
    %186 = vector.load %arg1[%c1_155, %c0_156, %c64_157] : memref<2x4x256xf32, #tpu.memory_space<vmem>>, vector<1x4x16xf32>
    %187 = vector.shape_cast %186 : vector<1x4x16xf32> to vector<4x16xf32>
    %188 = arith.truncf %187 : vector<4x16xf32> to vector<4x16xbf16>
    %c0_158 = arith.constant 0 : index
    %c91_159 = arith.constant 91 : index
    %189 = vector.load %arg5[%c0_158, %c91_159] : memref<4x324xbf16, #tpu.memory_space<vmem>>, vector<4x16xbf16>
    tpu.vector_store %arg5[%c0_158, %c91_159], %188 {strides = array<i32>} : memref<4x324xbf16, #tpu.memory_space<vmem>>, vector<4x16xbf16>,
    %c1_160 = arith.constant 1 : index
    %c0_161 = arith.constant 0 : index
    %c80_162 = arith.constant 80 : index
    %190 = vector.load %arg1[%c1_160, %c0_161, %c80_162] : memref<2x4x256xf32, #tpu.memory_space<vmem>>, vector<1x4x16xf32>
    %191 = vector.shape_cast %190 : vector<1x4x16xf32> to vector<4x16xf32>
    %192 = arith.truncf %191 : vector<4x16xf32> to vector<4x16xbf16>
    %c0_163 = arith.constant 0 : index
    %c109_164 = arith.constant 109 : index
    %193 = vector.load %arg5[%c0_163, %c109_164] : memref<4x324xbf16, #tpu.memory_space<vmem>>, vector<4x16xbf16>
    tpu.vector_store %arg5[%c0_163, %c109_164], %192 {strides = array<i32>} : memref<4x324xbf16, #tpu.memory_space<vmem>>, vector<4x16xbf16>,
    %c1_165 = arith.constant 1 : index
    %c0_166 = arith.constant 0 : index
    %c96_167 = arith.constant 96 : index
    %194 = vector.load %arg1[%c1_165, %c0_166, %c96_167] : memref<2x4x256xf32, #tpu.memory_space<vmem>>, vector<1x4x16xf32>
    %195 = vector.shape_cast %194 : vector<1x4x16xf32> to vector<4x16xf32>
    %196 = arith.truncf %195 : vector<4x16xf32> to vector<4x16xbf16>
    %c0_168 = arith.constant 0 : index
    %c127_169 = arith.constant 127 : index
    %197 = vector.load %arg5[%c0_168, %c127_169] : memref<4x324xbf16, #tpu.memory_space<vmem>>, vector<4x16xbf16>
    tpu.vector_store %arg5[%c0_168, %c127_169], %196 {strides = array<i32>} : memref<4x324xbf16, #tpu.memory_space<vmem>>, vector<4x16xbf16>,
    %c1_170 = arith.constant 1 : index
    %c0_171 = arith.constant 0 : index
    %c112_172 = arith.constant 112 : index
    %198 = vector.load %arg1[%c1_170, %c0_171, %c112_172] : memref<2x4x256xf32, #tpu.memory_space<vmem>>, vector<1x4x16xf32>
    %199 = vector.shape_cast %198 : vector<1x4x16xf32> to vector<4x16xf32>
    %200 = arith.truncf %199 : vector<4x16xf32> to vector<4x16xbf16>
    %c0_173 = arith.constant 0 : index
    %c145_174 = arith.constant 145 : index
    %201 = vector.load %arg5[%c0_173, %c145_174] : memref<4x324xbf16, #tpu.memory_space<vmem>>, vector<4x16xbf16>
    tpu.vector_store %arg5[%c0_173, %c145_174], %200 {strides = array<i32>} : memref<4x324xbf16, #tpu.memory_space<vmem>>, vector<4x16xbf16>,
    %c1_175 = arith.constant 1 : index
    %c0_176 = arith.constant 0 : index
    %c128_177 = arith.constant 128 : index
    %202 = vector.load %arg1[%c1_175, %c0_176, %c128_177] : memref<2x4x256xf32, #tpu.memory_space<vmem>>, vector<1x4x16xf32>
    %203 = vector.shape_cast %202 : vector<1x4x16xf32> to vector<4x16xf32>
    %204 = arith.truncf %203 : vector<4x16xf32> to vector<4x16xbf16>
    %c0_178 = arith.constant 0 : index
    %c163_179 = arith.constant 163 : index
    %205 = vector.load %arg5[%c0_178, %c163_179] : memref<4x324xbf16, #tpu.memory_space<vmem>>, vector<4x16xbf16>
    tpu.vector_store %arg5[%c0_178, %c163_179], %204 {strides = array<i32>} : memref<4x324xbf16, #tpu.memory_space<vmem>>, vector<4x16xbf16>,
    %c1_180 = arith.constant 1 : index
    %c0_181 = arith.constant 0 : index
    %c144_182 = arith.constant 144 : index
    %206 = vector.load %arg1[%c1_180, %c0_181, %c144_182] : memref<2x4x256xf32, #tpu.memory_space<vmem>>, vector<1x4x16xf32>
    %207 = vector.shape_cast %206 : vector<1x4x16xf32> to vector<4x16xf32>
    %208 = arith.truncf %207 : vector<4x16xf32> to vector<4x16xbf16>
    %c0_183 = arith.constant 0 : index
    %c181_184 = arith.constant 181 : index
    %209 = vector.load %arg5[%c0_183, %c181_184] : memref<4x324xbf16, #tpu.memory_space<vmem>>, vector<4x16xbf16>
    tpu.vector_store %arg5[%c0_183, %c181_184], %208 {strides = array<i32>} : memref<4x324xbf16, #tpu.memory_space<vmem>>, vector<4x16xbf16>,
    %c1_185 = arith.constant 1 : index
    %c0_186 = arith.constant 0 : index
    %c160_187 = arith.constant 160 : index
    %210 = vector.load %arg1[%c1_185, %c0_186, %c160_187] : memref<2x4x256xf32, #tpu.memory_space<vmem>>, vector<1x4x16xf32>
    %211 = vector.shape_cast %210 : vector<1x4x16xf32> to vector<4x16xf32>
    %212 = arith.truncf %211 : vector<4x16xf32> to vector<4x16xbf16>
    %c0_188 = arith.constant 0 : index
    %c199_189 = arith.constant 199 : index
    %213 = vector.load %arg5[%c0_188, %c199_189] : memref<4x324xbf16, #tpu.memory_space<vmem>>, vector<4x16xbf16>
    tpu.vector_store %arg5[%c0_188, %c199_189], %212 {strides = array<i32>} : memref<4x324xbf16, #tpu.memory_space<vmem>>, vector<4x16xbf16>,
    %c1_190 = arith.constant 1 : index
    %c0_191 = arith.constant 0 : index
    %c176_192 = arith.constant 176 : index
    %214 = vector.load %arg1[%c1_190, %c0_191, %c176_192] : memref<2x4x256xf32, #tpu.memory_space<vmem>>, vector<1x4x16xf32>
    %215 = vector.shape_cast %214 : vector<1x4x16xf32> to vector<4x16xf32>
    %216 = arith.truncf %215 : vector<4x16xf32> to vector<4x16xbf16>
    %c0_193 = arith.constant 0 : index
    %c217_194 = arith.constant 217 : index
    %217 = vector.load %arg5[%c0_193, %c217_194] : memref<4x324xbf16, #tpu.memory_space<vmem>>, vector<4x16xbf16>
    tpu.vector_store %arg5[%c0_193, %c217_194], %216 {strides = array<i32>} : memref<4x324xbf16, #tpu.memory_space<vmem>>, vector<4x16xbf16>,
    %c1_195 = arith.constant 1 : index
    %c0_196 = arith.constant 0 : index
    %c192_197 = arith.constant 192 : index
    %218 = vector.load %arg1[%c1_195, %c0_196, %c192_197] : memref<2x4x256xf32, #tpu.memory_space<vmem>>, vector<1x4x16xf32>
    %219 = vector.shape_cast %218 : vector<1x4x16xf32> to vector<4x16xf32>
    %220 = arith.truncf %219 : vector<4x16xf32> to vector<4x16xbf16>
    %c0_198 = arith.constant 0 : index
    %c235_199 = arith.constant 235 : index
    %221 = vector.load %arg5[%c0_198, %c235_199] : memref<4x324xbf16, #tpu.memory_space<vmem>>, vector<4x16xbf16>
    tpu.vector_store %arg5[%c0_198, %c235_199], %220 {strides = array<i32>} : memref<4x324xbf16, #tpu.memory_space<vmem>>, vector<4x16xbf16>,
    %c1_200 = arith.constant 1 : index
    %c0_201 = arith.constant 0 : index
    %c208_202 = arith.constant 208 : index
    %222 = vector.load %arg1[%c1_200, %c0_201, %c208_202] : memref<2x4x256xf32, #tpu.memory_space<vmem>>, vector<1x4x16xf32>
    %223 = vector.shape_cast %222 : vector<1x4x16xf32> to vector<4x16xf32>
    %224 = arith.truncf %223 : vector<4x16xf32> to vector<4x16xbf16>
    %c0_203 = arith.constant 0 : index
    %c253_204 = arith.constant 253 : index
    %225 = vector.load %arg5[%c0_203, %c253_204] : memref<4x324xbf16, #tpu.memory_space<vmem>>, vector<4x16xbf16>
    tpu.vector_store %arg5[%c0_203, %c253_204], %224 {strides = array<i32>} : memref<4x324xbf16, #tpu.memory_space<vmem>>, vector<4x16xbf16>,
    %c1_205 = arith.constant 1 : index
    %c0_206 = arith.constant 0 : index
    %c224_207 = arith.constant 224 : index
    %226 = vector.load %arg1[%c1_205, %c0_206, %c224_207] : memref<2x4x256xf32, #tpu.memory_space<vmem>>, vector<1x4x16xf32>
    %227 = vector.shape_cast %226 : vector<1x4x16xf32> to vector<4x16xf32>
    %228 = arith.truncf %227 : vector<4x16xf32> to vector<4x16xbf16>
    %c0_208 = arith.constant 0 : index
    %c271_209 = arith.constant 271 : index
    %229 = vector.load %arg5[%c0_208, %c271_209] : memref<4x324xbf16, #tpu.memory_space<vmem>>, vector<4x16xbf16>
    tpu.vector_store %arg5[%c0_208, %c271_209], %228 {strides = array<i32>} : memref<4x324xbf16, #tpu.memory_space<vmem>>, vector<4x16xbf16>,
    %c1_210 = arith.constant 1 : index
    %c0_211 = arith.constant 0 : index
    %c240_212 = arith.constant 240 : index
    %230 = vector.load %arg1[%c1_210, %c0_211, %c240_212] : memref<2x4x256xf32, #tpu.memory_space<vmem>>, vector<1x4x16xf32>
    %231 = vector.shape_cast %230 : vector<1x4x16xf32> to vector<4x16xf32>
    %232 = arith.truncf %231 : vector<4x16xf32> to vector<4x16xbf16>
    %c0_213 = arith.constant 0 : index
    %c289_214 = arith.constant 289 : index
    %233 = vector.load %arg5[%c0_213, %c289_214] : memref<4x324xbf16, #tpu.memory_space<vmem>>, vector<4x16xbf16>
    tpu.vector_store %arg5[%c0_213, %c289_214], %232 {strides = array<i32>} : memref<4x324xbf16, #tpu.memory_space<vmem>>, vector<4x16xbf16>,
    %c0_215 = arith.constant 0 : index
    %c0_216 = arith.constant 0 : index
    %234 = vector.load %arg2[%c0_215, %c0_216] : memref<8x36xbf16, #tpu.memory_space<vmem>>, vector<8x4xbf16>
    %c0_217 = arith.constant 0 : index
    %c0_218 = arith.constant 0 : index
    %235 = vector.load %arg5[%c0_217, %c0_218] : memref<4x324xbf16, #tpu.memory_space<vmem>>, vector<4x286xbf16>
    %cst_219 = arith.constant dense<0.000000e+00> : vector<8x286xf32>
    %236 = tpu.matmul %234, %235, %cst_219 {dimension_numbers = #tpu.dot_dimension_numbers<[1], [0], [0], [1], [0, 0, 1, 1], [], []>} : vector<8x4xbf16>, vector<4x286xbf16>, vector<8x286xf32> -> vector<8x286xf32>
    %c0_220 = arith.constant 0 : index
    %c4_221 = arith.constant 4 : index
    %237 = vector.load %arg2[%c0_220, %c4_221] : memref<8x36xbf16, #tpu.memory_space<vmem>>, vector<8x4xbf16>
    %c0_222 = arith.constant 0 : index
    %c1_223 = arith.constant 1 : index
    %238 = vector.load %arg5[%c0_222, %c1_223] : memref<4x324xbf16, #tpu.memory_space<vmem>>, vector<4x286xbf16>
    %cst_224 = arith.constant dense<0.000000e+00> : vector<8x286xf32>
    %239 = tpu.matmul %237, %238, %cst_224 {dimension_numbers = #tpu.dot_dimension_numbers<[1], [0], [0], [1], [0, 0, 1, 1], [], []>} : vector<8x4xbf16>, vector<4x286xbf16>, vector<8x286xf32> -> vector<8x286xf32>
    %240 = arith.addf %236, %239 : vector<8x286xf32>
    %c0_225 = arith.constant 0 : index
    %c8_226 = arith.constant 8 : index
    %241 = vector.load %arg2[%c0_225, %c8_226] : memref<8x36xbf16, #tpu.memory_space<vmem>>, vector<8x4xbf16>
    %c0_227 = arith.constant 0 : index
    %c2_228 = arith.constant 2 : index
    %242 = vector.load %arg5[%c0_227, %c2_228] : memref<4x324xbf16, #tpu.memory_space<vmem>>, vector<4x286xbf16>
    %cst_229 = arith.constant dense<0.000000e+00> : vector<8x286xf32>
    %243 = tpu.matmul %241, %242, %cst_229 {dimension_numbers = #tpu.dot_dimension_numbers<[1], [0], [0], [1], [0, 0, 1, 1], [], []>} : vector<8x4xbf16>, vector<4x286xbf16>, vector<8x286xf32> -> vector<8x286xf32>
    %244 = arith.addf %240, %243 : vector<8x286xf32>
    %c0_230 = arith.constant 0 : index
    %c12_231 = arith.constant 12 : index
    %245 = vector.load %arg2[%c0_230, %c12_231] : memref<8x36xbf16, #tpu.memory_space<vmem>>, vector<8x4xbf16>
    %c0_232 = arith.constant 0 : index
    %c18_233 = arith.constant 18 : index
    %246 = vector.load %arg5[%c0_232, %c18_233] : memref<4x324xbf16, #tpu.memory_space<vmem>>, vector<4x286xbf16>
    %cst_234 = arith.constant dense<0.000000e+00> : vector<8x286xf32>
    %247 = tpu.matmul %245, %246, %cst_234 {dimension_numbers = #tpu.dot_dimension_numbers<[1], [0], [0], [1], [0, 0, 1, 1], [], []>} : vector<8x4xbf16>, vector<4x286xbf16>, vector<8x286xf32> -> vector<8x286xf32>
    %248 = arith.addf %244, %247 : vector<8x286xf32>
    %c0_235 = arith.constant 0 : index
    %c16_236 = arith.constant 16 : index
    %249 = vector.load %arg2[%c0_235, %c16_236] : memref<8x36xbf16, #tpu.memory_space<vmem>>, vector<8x4xbf16>
    %c0_237 = arith.constant 0 : index
    %c19_238 = arith.constant 19 : index
    %250 = vector.load %arg5[%c0_237, %c19_238] : memref<4x324xbf16, #tpu.memory_space<vmem>>, vector<4x286xbf16>
    %cst_239 = arith.constant dense<0.000000e+00> : vector<8x286xf32>
    %251 = tpu.matmul %249, %250, %cst_239 {dimension_numbers = #tpu.dot_dimension_numbers<[1], [0], [0], [1], [0, 0, 1, 1], [], []>} : vector<8x4xbf16>, vector<4x286xbf16>, vector<8x286xf32> -> vector<8x286xf32>
    %252 = arith.addf %248, %251 : vector<8x286xf32>
    %c0_240 = arith.constant 0 : index
    %c20_241 = arith.constant 20 : index
    %253 = vector.load %arg2[%c0_240, %c20_241] : memref<8x36xbf16, #tpu.memory_space<vmem>>, vector<8x4xbf16>
    %c0_242 = arith.constant 0 : index
    %c20_243 = arith.constant 20 : index
    %254 = vector.load %arg5[%c0_242, %c20_243] : memref<4x324xbf16, #tpu.memory_space<vmem>>, vector<4x286xbf16>
    %cst_244 = arith.constant dense<0.000000e+00> : vector<8x286xf32>
    %255 = tpu.matmul %253, %254, %cst_244 {dimension_numbers = #tpu.dot_dimension_numbers<[1], [0], [0], [1], [0, 0, 1, 1], [], []>} : vector<8x4xbf16>, vector<4x286xbf16>, vector<8x286xf32> -> vector<8x286xf32>
    %256 = arith.addf %252, %255 : vector<8x286xf32>
    %c0_245 = arith.constant 0 : index
    %c24_246 = arith.constant 24 : index
    %257 = vector.load %arg2[%c0_245, %c24_246] : memref<8x36xbf16, #tpu.memory_space<vmem>>, vector<8x4xbf16>
    %c0_247 = arith.constant 0 : index
    %c36_248 = arith.constant 36 : index
    %258 = vector.load %arg5[%c0_247, %c36_248] : memref<4x324xbf16, #tpu.memory_space<vmem>>, vector<4x286xbf16>
    %cst_249 = arith.constant dense<0.000000e+00> : vector<8x286xf32>
    %259 = tpu.matmul %257, %258, %cst_249 {dimension_numbers = #tpu.dot_dimension_numbers<[1], [0], [0], [1], [0, 0, 1, 1], [], []>} : vector<8x4xbf16>, vector<4x286xbf16>, vector<8x286xf32> -> vector<8x286xf32>
    %260 = arith.addf %256, %259 : vector<8x286xf32>
    %c0_250 = arith.constant 0 : index
    %c28_251 = arith.constant 28 : index
    %261 = vector.load %arg2[%c0_250, %c28_251] : memref<8x36xbf16, #tpu.memory_space<vmem>>, vector<8x4xbf16>
    %c0_252 = arith.constant 0 : index
    %c37_253 = arith.constant 37 : index
    %262 = vector.load %arg5[%c0_252, %c37_253] : memref<4x324xbf16, #tpu.memory_space<vmem>>, vector<4x286xbf16>
    %cst_254 = arith.constant dense<0.000000e+00> : vector<8x286xf32>
    %263 = tpu.matmul %261, %262, %cst_254 {dimension_numbers = #tpu.dot_dimension_numbers<[1], [0], [0], [1], [0, 0, 1, 1], [], []>} : vector<8x4xbf16>, vector<4x286xbf16>, vector<8x286xf32> -> vector<8x286xf32>
    %264 = arith.addf %260, %263 : vector<8x286xf32>
    %c0_255 = arith.constant 0 : index
    %c32_256 = arith.constant 32 : index
    %265 = vector.load %arg2[%c0_255, %c32_256] : memref<8x36xbf16, #tpu.memory_space<vmem>>, vector<8x4xbf16>
    %c0_257 = arith.constant 0 : index
    %c38_258 = arith.constant 38 : index
    %266 = vector.load %arg5[%c0_257, %c38_258] : memref<4x324xbf16, #tpu.memory_space<vmem>>, vector<4x286xbf16>
    %cst_259 = arith.constant dense<0.000000e+00> : vector<8x286xf32>
    %267 = tpu.matmul %265, %266, %cst_259 {dimension_numbers = #tpu.dot_dimension_numbers<[1], [0], [0], [1], [0, 0, 1, 1], [], []>} : vector<8x4xbf16>, vector<4x286xbf16>, vector<8x286xf32> -> vector<8x286xf32>
    %268 = arith.addf %264, %267 : vector<8x286xf32>
    %c0_260 = arith.constant 0 : index
    %c0_261 = arith.constant 0 : index
    %269 = vector.load %arg3[%c0_260, %c0_261] : memref<8x1xf32, #tpu.memory_space<vmem>>, vector<8x1xf32>
    %270 = vector.broadcast %269 : vector<8x1xf32> to vector<8x286xf32>
    %271 = arith.addf %268, %270 : vector<8x286xf32>
    %cst_262 = arith.constant 0.000000e+00 : f32
    %272 = vector.broadcast %cst_262 : f32 to vector<8x286xf32>
    %273 = arith.maximumf %271, %272 : vector<8x286xf32>
    %274 = vector.extract_strided_slice %273 {offsets = [0, 0], sizes = [8, 16], strides = [1, 1]} : vector<8x286xf32> to vector<8x16xf32>
    %c1_263 = arith.constant 1 : index
    %c0_264 = arith.constant 0 : index
    %c0_265 = arith.constant 0 : index
    %275 = vector.load %arg4[%c1_263, %c0_264, %c0_265] : memref<2x8x256xf32, #tpu.memory_space<vmem>>, vector<1x8x16xf32>
    %276 = vector.shape_cast %275 : vector<1x8x16xf32> to vector<8x16xf32>
    %277 = vector.shape_cast %274 : vector<8x16xf32> to vector<1x8x16xf32>
    tpu.vector_store %arg4[%c1_263, %c0_264, %c0_265], %277 {strides = array<i32>} : memref<2x8x256xf32, #tpu.memory_space<vmem>>, vector<1x8x16xf32>,
    %278 = vector.extract_strided_slice %273 {offsets = [0, 18], sizes = [8, 16], strides = [1, 1]} : vector<8x286xf32> to vector<8x16xf32>
    %c1_266 = arith.constant 1 : index
    %c0_267 = arith.constant 0 : index
    %c16_268 = arith.constant 16 : index
    %279 = vector.load %arg4[%c1_266, %c0_267, %c16_268] : memref<2x8x256xf32, #tpu.memory_space<vmem>>, vector<1x8x16xf32>
    %280 = vector.shape_cast %279 : vector<1x8x16xf32> to vector<8x16xf32>
    %281 = vector.shape_cast %278 : vector<8x16xf32> to vector<1x8x16xf32>
    tpu.vector_store %arg4[%c1_266, %c0_267, %c16_268], %281 {strides = array<i32>} : memref<2x8x256xf32, #tpu.memory_space<vmem>>, vector<1x8x16xf32>,
    %282 = vector.extract_strided_slice %273 {offsets = [0, 36], sizes = [8, 16], strides = [1, 1]} : vector<8x286xf32> to vector<8x16xf32>
    %c1_269 = arith.constant 1 : index
    %c0_270 = arith.constant 0 : index
    %c32_271 = arith.constant 32 : index
    %283 = vector.load %arg4[%c1_269, %c0_270, %c32_271] : memref<2x8x256xf32, #tpu.memory_space<vmem>>, vector<1x8x16xf32>
    %284 = vector.shape_cast %283 : vector<1x8x16xf32> to vector<8x16xf32>
    %285 = vector.shape_cast %282 : vector<8x16xf32> to vector<1x8x16xf32>
    tpu.vector_store %arg4[%c1_269, %c0_270, %c32_271], %285 {strides = array<i32>} : memref<2x8x256xf32, #tpu.memory_space<vmem>>, vector<1x8x16xf32>,
    %286 = vector.extract_strided_slice %273 {offsets = [0, 54], sizes = [8, 16], strides = [1, 1]} : vector<8x286xf32> to vector<8x16xf32>
    %c1_272 = arith.constant 1 : index
    %c0_273 = arith.constant 0 : index
    %c48_274 = arith.constant 48 : index
    %287 = vector.load %arg4[%c1_272, %c0_273, %c48_274] : memref<2x8x256xf32, #tpu.memory_space<vmem>>, vector<1x8x16xf32>
    %288 = vector.shape_cast %287 : vector<1x8x16xf32> to vector<8x16xf32>
    %289 = vector.shape_cast %286 : vector<8x16xf32> to vector<1x8x16xf32>
    tpu.vector_store %arg4[%c1_272, %c0_273, %c48_274], %289 {strides = array<i32>} : memref<2x8x256xf32, #tpu.memory_space<vmem>>, vector<1x8x16xf32>,
    %290 = vector.extract_strided_slice %273 {offsets = [0, 72], sizes = [8, 16], strides = [1, 1]} : vector<8x286xf32> to vector<8x16xf32>
    %c1_275 = arith.constant 1 : index
    %c0_276 = arith.constant 0 : index
    %c64_277 = arith.constant 64 : index
    %291 = vector.load %arg4[%c1_275, %c0_276, %c64_277] : memref<2x8x256xf32, #tpu.memory_space<vmem>>, vector<1x8x16xf32>
    %292 = vector.shape_cast %291 : vector<1x8x16xf32> to vector<8x16xf32>
    %293 = vector.shape_cast %290 : vector<8x16xf32> to vector<1x8x16xf32>
    tpu.vector_store %arg4[%c1_275, %c0_276, %c64_277], %293 {strides = array<i32>} : memref<2x8x256xf32, #tpu.memory_space<vmem>>, vector<1x8x16xf32>,
    %294 = vector.extract_strided_slice %273 {offsets = [0, 90], sizes = [8, 16], strides = [1, 1]} : vector<8x286xf32> to vector<8x16xf32>
    %c1_278 = arith.constant 1 : index
    %c0_279 = arith.constant 0 : index
    %c80_280 = arith.constant 80 : index
    %295 = vector.load %arg4[%c1_278, %c0_279, %c80_280] : memref<2x8x256xf32, #tpu.memory_space<vmem>>, vector<1x8x16xf32>
    %296 = vector.shape_cast %295 : vector<1x8x16xf32> to vector<8x16xf32>
    %297 = vector.shape_cast %294 : vector<8x16xf32> to vector<1x8x16xf32>
    tpu.vector_store %arg4[%c1_278, %c0_279, %c80_280], %297 {strides = array<i32>} : memref<2x8x256xf32, #tpu.memory_space<vmem>>, vector<1x8x16xf32>,
    %298 = vector.extract_strided_slice %273 {offsets = [0, 108], sizes = [8, 16], strides = [1, 1]} : vector<8x286xf32> to vector<8x16xf32>
    %c1_281 = arith.constant 1 : index
    %c0_282 = arith.constant 0 : index
    %c96_283 = arith.constant 96 : index
    %299 = vector.load %arg4[%c1_281, %c0_282, %c96_283] : memref<2x8x256xf32, #tpu.memory_space<vmem>>, vector<1x8x16xf32>
    %300 = vector.shape_cast %299 : vector<1x8x16xf32> to vector<8x16xf32>
    %301 = vector.shape_cast %298 : vector<8x16xf32> to vector<1x8x16xf32>
    tpu.vector_store %arg4[%c1_281, %c0_282, %c96_283], %301 {strides = array<i32>} : memref<2x8x256xf32, #tpu.memory_space<vmem>>, vector<1x8x16xf32>,
    %302 = vector.extract_strided_slice %273 {offsets = [0, 126], sizes = [8, 16], strides = [1, 1]} : vector<8x286xf32> to vector<8x16xf32>
    %c1_284 = arith.constant 1 : index
    %c0_285 = arith.constant 0 : index
    %c112_286 = arith.constant 112 : index
    %303 = vector.load %arg4[%c1_284, %c0_285, %c112_286] : memref<2x8x256xf32, #tpu.memory_space<vmem>>, vector<1x8x16xf32>
    %304 = vector.shape_cast %303 : vector<1x8x16xf32> to vector<8x16xf32>
    %305 = vector.shape_cast %302 : vector<8x16xf32> to vector<1x8x16xf32>
    tpu.vector_store %arg4[%c1_284, %c0_285, %c112_286], %305 {strides = array<i32>} : memref<2x8x256xf32, #tpu.memory_space<vmem>>, vector<1x8x16xf32>,
    %306 = vector.extract_strided_slice %273 {offsets = [0, 144], sizes = [8, 16], strides = [1, 1]} : vector<8x286xf32> to vector<8x16xf32>
    %c1_287 = arith.constant 1 : index
    %c0_288 = arith.constant 0 : index
    %c128_289 = arith.constant 128 : index
    %307 = vector.load %arg4[%c1_287, %c0_288, %c128_289] : memref<2x8x256xf32, #tpu.memory_space<vmem>>, vector<1x8x16xf32>
    %308 = vector.shape_cast %307 : vector<1x8x16xf32> to vector<8x16xf32>
    %309 = vector.shape_cast %306 : vector<8x16xf32> to vector<1x8x16xf32>
    tpu.vector_store %arg4[%c1_287, %c0_288, %c128_289], %309 {strides = array<i32>} : memref<2x8x256xf32, #tpu.memory_space<vmem>>, vector<1x8x16xf32>,
    %310 = vector.extract_strided_slice %273 {offsets = [0, 162], sizes = [8, 16], strides = [1, 1]} : vector<8x286xf32> to vector<8x16xf32>
    %c1_290 = arith.constant 1 : index
    %c0_291 = arith.constant 0 : index
    %c144_292 = arith.constant 144 : index
    %311 = vector.load %arg4[%c1_290, %c0_291, %c144_292] : memref<2x8x256xf32, #tpu.memory_space<vmem>>, vector<1x8x16xf32>
    %312 = vector.shape_cast %311 : vector<1x8x16xf32> to vector<8x16xf32>
    %313 = vector.shape_cast %310 : vector<8x16xf32> to vector<1x8x16xf32>
    tpu.vector_store %arg4[%c1_290, %c0_291, %c144_292], %313 {strides = array<i32>} : memref<2x8x256xf32, #tpu.memory_space<vmem>>, vector<1x8x16xf32>,
    %314 = vector.extract_strided_slice %273 {offsets = [0, 180], sizes = [8, 16], strides = [1, 1]} : vector<8x286xf32> to vector<8x16xf32>
    %c1_293 = arith.constant 1 : index
    %c0_294 = arith.constant 0 : index
    %c160_295 = arith.constant 160 : index
    %315 = vector.load %arg4[%c1_293, %c0_294, %c160_295] : memref<2x8x256xf32, #tpu.memory_space<vmem>>, vector<1x8x16xf32>
    %316 = vector.shape_cast %315 : vector<1x8x16xf32> to vector<8x16xf32>
    %317 = vector.shape_cast %314 : vector<8x16xf32> to vector<1x8x16xf32>
    tpu.vector_store %arg4[%c1_293, %c0_294, %c160_295], %317 {strides = array<i32>} : memref<2x8x256xf32, #tpu.memory_space<vmem>>, vector<1x8x16xf32>,
    %318 = vector.extract_strided_slice %273 {offsets = [0, 198], sizes = [8, 16], strides = [1, 1]} : vector<8x286xf32> to vector<8x16xf32>
    %c1_296 = arith.constant 1 : index
    %c0_297 = arith.constant 0 : index
    %c176_298 = arith.constant 176 : index
    %319 = vector.load %arg4[%c1_296, %c0_297, %c176_298] : memref<2x8x256xf32, #tpu.memory_space<vmem>>, vector<1x8x16xf32>
    %320 = vector.shape_cast %319 : vector<1x8x16xf32> to vector<8x16xf32>
    %321 = vector.shape_cast %318 : vector<8x16xf32> to vector<1x8x16xf32>
    tpu.vector_store %arg4[%c1_296, %c0_297, %c176_298], %321 {strides = array<i32>} : memref<2x8x256xf32, #tpu.memory_space<vmem>>, vector<1x8x16xf32>,
    %322 = vector.extract_strided_slice %273 {offsets = [0, 216], sizes = [8, 16], strides = [1, 1]} : vector<8x286xf32> to vector<8x16xf32>
    %c1_299 = arith.constant 1 : index
    %c0_300 = arith.constant 0 : index
    %c192_301 = arith.constant 192 : index
    %323 = vector.load %arg4[%c1_299, %c0_300, %c192_301] : memref<2x8x256xf32, #tpu.memory_space<vmem>>, vector<1x8x16xf32>
    %324 = vector.shape_cast %323 : vector<1x8x16xf32> to vector<8x16xf32>
    %325 = vector.shape_cast %322 : vector<8x16xf32> to vector<1x8x16xf32>
    tpu.vector_store %arg4[%c1_299, %c0_300, %c192_301], %325 {strides = array<i32>} : memref<2x8x256xf32, #tpu.memory_space<vmem>>, vector<1x8x16xf32>,
    %326 = vector.extract_strided_slice %273 {offsets = [0, 234], sizes = [8, 16], strides = [1, 1]} : vector<8x286xf32> to vector<8x16xf32>
    %c1_302 = arith.constant 1 : index
    %c0_303 = arith.constant 0 : index
    %c208_304 = arith.constant 208 : index
    %327 = vector.load %arg4[%c1_302, %c0_303, %c208_304] : memref<2x8x256xf32, #tpu.memory_space<vmem>>, vector<1x8x16xf32>
    %328 = vector.shape_cast %327 : vector<1x8x16xf32> to vector<8x16xf32>
    %329 = vector.shape_cast %326 : vector<8x16xf32> to vector<1x8x16xf32>
    tpu.vector_store %arg4[%c1_302, %c0_303, %c208_304], %329 {strides = array<i32>} : memref<2x8x256xf32, #tpu.memory_space<vmem>>, vector<1x8x16xf32>,
    %330 = vector.extract_strided_slice %273 {offsets = [0, 252], sizes = [8, 16], strides = [1, 1]} : vector<8x286xf32> to vector<8x16xf32>
    %c1_305 = arith.constant 1 : index
    %c0_306 = arith.constant 0 : index
    %c224_307 = arith.constant 224 : index
    %331 = vector.load %arg4[%c1_305, %c0_306, %c224_307] : memref<2x8x256xf32, #tpu.memory_space<vmem>>, vector<1x8x16xf32>
    %332 = vector.shape_cast %331 : vector<1x8x16xf32> to vector<8x16xf32>
    %333 = vector.shape_cast %330 : vector<8x16xf32> to vector<1x8x16xf32>
    tpu.vector_store %arg4[%c1_305, %c0_306, %c224_307], %333 {strides = array<i32>} : memref<2x8x256xf32, #tpu.memory_space<vmem>>, vector<1x8x16xf32>,
    %334 = vector.extract_strided_slice %273 {offsets = [0, 270], sizes = [8, 16], strides = [1, 1]} : vector<8x286xf32> to vector<8x16xf32>
    %c1_308 = arith.constant 1 : index
    %c0_309 = arith.constant 0 : index
    %c240_310 = arith.constant 240 : index
    %335 = vector.load %arg4[%c1_308, %c0_309, %c240_310] : memref<2x8x256xf32, #tpu.memory_space<vmem>>, vector<1x8x16xf32>
    %336 = vector.shape_cast %335 : vector<1x8x16xf32> to vector<8x16xf32>
    %337 = vector.shape_cast %334 : vector<8x16xf32> to vector<1x8x16xf32>
    tpu.vector_store %arg4[%c1_308, %c0_309, %c240_310], %337 {strides = array<i32>} : memref<2x8x256xf32, #tpu.memory_space<vmem>>, vector<1x8x16xf32>,
    return
  }
  func.func @transform_0(%arg0: i32) -> (i32, i32, i32) {
    %c0_i32 = arith.constant 0 : i32
    %c0_i32_0 = arith.constant 0 : i32
    %c0_i32_1 = arith.constant 0 : i32
    return %arg0, %c0_i32, %c0_i32_0 : i32, i32, i32
  }
  func.func @transform_1(%arg0: i32) -> (i32, i32) {
    %c0_i32 = arith.constant 0 : i32
    %c0_i32_0 = arith.constant 0 : i32
    %c0_i32_1 = arith.constant 0 : i32
    return %c0_i32, %c0_i32_0 : i32, i32
  }
  func.func @transform_2(%arg0: i32) -> (i32, i32) {
    %c0_i32 = arith.constant 0 : i32
    %c0_i32_0 = arith.constant 0 : i32
    %c0_i32_1 = arith.constant 0 : i32
    return %c0_i32, %c0_i32_0 : i32, i32
  }
  func.func @transform_3(%arg0: i32) -> (i32, i32, i32) {
    %c0_i32 = arith.constant 0 : i32
    %c0_i32_0 = arith.constant 0 : i32
    %c0_i32_1 = arith.constant 0 : i32
    return %arg0, %c0_i32, %c0_i32_0 : i32, i32, i32
  }
}

</mosaic_0001>

<llo_original>
// kernel: tpu_custom_call.1
$region0: #{tpu_custom_call.1}
  #allocation0 [shape = 'u32[]', space=smem, size = 0x4, offset = 0x4, fixed_abs, tag = 'smem constant byte address 0x4 - core index']
  #allocation1 [shape = 'u32[72,128]{1,0:T(1,128)}', space=vmem, size = 0x9000, scoped, tag = 'internal scratch']
  #allocation2 [shape = 'bf16[4,324]{1,0:T(4,128)(2,1)}', space=vmem, size = 0xc00, scoped, tag = 'scratch operand']
  %s0 = inlined_call_operand.hbm [shape: f32[2,4,256], index: 0, kind: input, shape index: {}]
  %s1 = inlined_call_operand.vmem [shape: bf16[8,36], index: 1, kind: input, shape index: {}]
  %s2 = inlined_call_operand.vmem [shape: f32[8,1], index: 2, kind: input, shape index: {}]
  %s3 = inlined_call_operand.hbm [shape: f32[2,8,256], index: 3, kind: output, shape index: {}]
  %s4 = sld [smem:[#allocation0]]
  $region26: #{tpu_custom_call.1} parent=0
    _
  %s6 = ssub.s32 1, %s4
  %s7 = scalar_select 0, %s6, %s4
  $region1: #{tpu_custom_call.1} parent=0
    #allocation3 [shape = 'u8[8192]{0}', space=vmem, size = 0x2000, scoped, tag = 'input window, operand 0, single buffered']
    #allocation4 [shape = 's32[1]{0}', space=sflag, size = 0x4, scoped, tag = 'scoped memory for tpu_custom_call.1']
    #allocation5 [shape = 's32[1]{0}', space=sflag, size = 0x4, scoped, tag = 'scoped memory for tpu_custom_call.1']
    #allocation6 [shape = 'u8[16384]{0}', space=vmem, size = 0x4000, scoped, tag = 'output window, operand 0, single buffered']
    %8 = vsyncpa [#allocation4], 0
    %9 = vsyncpa [#allocation5], 0
    // Predicated region
    $region2: #{tpu_custom_call.1} parent=1 // pred_check
      _
    $region3: #{tpu_custom_call.1} parent=1 // pred_check_branch
      %11 = sbr.rel (0) target = $region5
    $region4: #{tpu_custom_call.1} parent=1 // pred_region
      %13 = vsyncadd [#allocation4], 0
      %s14 = sshll.u32 %s0, 4
      %s15 = int_to_ptr.hbm [resolvable:$true] %s14
      %s16 = sshll.u32 [#allocation3], 4
      %s17 = int_to_ptr.vmem [resolvable:$true] %s16
      %22 = dma.hbm_to_vmem [thread:$0]  %s15, 256, %s17, [#allocation4], 128, 128, 8
    $region5: #{tpu_custom_call.1} parent=1 // pred_fallthru
      _
    // Predicated region
    $region6: #{tpu_custom_call.1} parent=1 // pred_check
      _
    $region7: #{tpu_custom_call.1} parent=1 // pred_check_branch
      %24 = sbr.rel (0) target = $region9
    $region8: #{tpu_custom_call.1} parent=1 // pred_region
      _
    $region9: #{tpu_custom_call.1} parent=1 // pred_fallthru
      _
    // Predicated region
    $region10: #{tpu_custom_call.1} parent=1 // pred_check
      _
    $region11: #{tpu_custom_call.1} parent=1 // pred_check_branch
      %26 = sbr.rel (0) target = $region13
    $region12: #{tpu_custom_call.1} parent=1 // pred_region
      _
    $region13: #{tpu_custom_call.1} parent=1 // pred_fallthru
      _
    // Predicated region
    $region14: #{tpu_custom_call.1} parent=1 // pred_check
      _
    $region15: #{tpu_custom_call.1} parent=1 // pred_check_branch
      %28 = sbr.rel (0) target = $region17
    $region16: #{tpu_custom_call.1} parent=1 // pred_region
      %30 = dma.done [#allocation4], 256
    $region17: #{tpu_custom_call.1} parent=1 // pred_fallthru
      _
    %vm32 = vcmask 1041408
    %vm33 = vcmask 1043458
    %vm34 = vmor %vm33, %vm32
    %vm35 = vcmask 553988
    %vm36 = vmor %vm35, %vm34
    %37 = vst.msk [vmem:[#allocation2] sm:$0x3f] %vm36, 0
    %v38 = vld [vmem:[#allocation3] sm:$0xf]
    %v39 = vpack.c.bf16 %v38, %v38
    %v41 = vrot.slane %v39, 2
    %v44 = vsel %vm32, %v39, %v41
    %46 = vrot.lane.b32.xlu0 %v44, 19
    %v47 = vpop.permute.xlu0 %46
    %vm49 = vcmask 279704
    %50 = vst.msk [vmem:[#allocation2] sm:$0x3] %vm49, %v47
    %v51 = vld [vmem:[#allocation3] sm:$0xf]
    %v52 = vpack.c.bf16 %v51, %v51
    %v54 = vrot.slane %v52, 2
    %v57 = vsel %vm32, %v52, %v54
    %59 = vrot.lane.b32.xlu0 %v57, 21
    %v60 = vpop.permute.xlu0 %59
    %vm62 = vcmask 427304
    %63 = vst.msk [vmem:[#allocation2] sm:$0x3] %vm62, %v60
    %v64 = vld [vmem:[#allocation3] sm:$0xf]
    %v65 = vpack.c.bf16 %v64, %v64
    %v67 = vrot.slane %v65, 2
    %v70 = vsel %vm32, %v65, %v67
    %72 = vrot.lane.b32.xlu0 %v70, 23
    %v73 = vpop.permute.xlu0 %72
    %vm75 = vcmask 574904
    %76 = vst.msk [vmem:[#allocation2] sm:$0x3] %vm75, %v73
    %v77 = vld [vmem:[#allocation3] sm:$0xf]
    %v78 = vpack.c.bf16 %v77, %v77
    %v80 = vrot.slane %v78, 2
    %v83 = vsel %vm32, %v78, %v80
    %85 = vrot.lane.b32.xlu0 %v83, 25
    %v86 = vpop.permute.xlu0 %85
    %vm88 = vcmask 722504
    %89 = vst.msk [vmem:[#allocation2] sm:$0x3] %vm88, %v86
    %v90 = vld [vmem:[#allocation3] sm:$0xf]
    %v91 = vpack.c.bf16 %v90, %v90
    %v93 = vrot.slane %v91, 2
    %v96 = vsel %vm32, %v91, %v93
    %98 = vrot.lane.b32.xlu0 %v96, 27
    %v99 = vpop.permute.xlu0 %98
    %vm101 = vcmask 870104
    %102 = vst.msk [vmem:[#allocation2] sm:$0x3] %vm101, %v99
    %v103 = vld [vmem:[#allocation3] sm:$0xf]
    %v104 = vpack.c.bf16 %v103, %v103
    %v106 = vrot.slane %v104, 2
    %v109 = vsel %vm32, %v104, %v106
    %111 = vrot.lane.b32.xlu0 %v109, 29
    %v112 = vpop.permute.xlu0 %111
    %vm114 = vcmask 1017704
    %115 = vst.msk [vmem:[#allocation2] sm:$0x3] %vm114, %v112
    %v116 = vld [vmem:[#allocation3] sm:$0xf]
    %v117 = vpack.c.bf16 %v116, %v116
    %v119 = vrot.slane %v117, 2
    %v122 = vsel %vm32, %v117, %v119
    %124 = vrot.lane.b32.xlu0 %v122, 31
    %v125 = vpop.permute.xlu0 %124
    %v126 = vrot.slane %v125, 6
    %vm127 = vcmask 252928
    %v128 = vsel %vm127, %v126, %v125
    %vm130 = vcmask 1042424
    %vm131 = vcmask 117762
    %vm132 = vmor %vm131, %vm130
    %133 = vst.msk [vmem:[#allocation2] sm:$0xf] %vm132, %v128
    %v134 = vld [vmem:[#allocation3] sm:$0xf]
    %v135 = vpack.c.bf16 %v134, %v134
    %v137 = vrot.slane %v135, 2
    %v140 = vsel %vm32, %v135, %v137
    %142 = vrot.lane.b32.xlu0 %v140, 33
    %v143 = vpop.permute.xlu0 %142
    %vm145 = vcmask 263304
    %146 = vst.msk [vmem:[#allocation2 + $0x2] sm:$0x3] %vm145, %v143
    %v147 = vld [vmem:[#allocation3 + $0x4] sm:$0xf]
    %v148 = vpack.c.bf16 %v147, %v147
    %v150 = vrot.slane %v148, 2
    %v153 = vsel %vm32, %v148, %v150
    %155 = vrot.lane.b32.xlu0 %v153, 35
    %v156 = vpop.permute.xlu0 %155
    %vm158 = vcmask 410904
    %159 = vst.msk [vmem:[#allocation2 + $0x2] sm:$0x3] %vm158, %v156
    %v160 = vld [vmem:[#allocation3 + $0x4] sm:$0xf]
    %v161 = vpack.c.bf16 %v160, %v160
    %v163 = vrot.slane %v161, 2
    %v166 = vsel %vm32, %v161, %v163
    %168 = vrot.lane.b32.xlu0 %v166, 37
    %v169 = vpop.permute.xlu0 %168
    %vm171 = vcmask 558504
    %172 = vst.msk [vmem:[#allocation2 + $0x2] sm:$0x3] %vm171, %v169
    %v173 = vld [vmem:[#allocation3 + $0x4] sm:$0xf]
    %v174 = vpack.c.bf16 %v173, %v173
    %v176 = vrot.slane %v174, 2
    %v179 = vsel %vm32, %v174, %v176
    %181 = vrot.lane.b32.xlu0 %v179, 39
    %v182 = vpop.permute.xlu0 %181
    %vm184 = vcmask 706104
    %185 = vst.msk [vmem:[#allocation2 + $0x2] sm:$0x3] %vm184, %v182
    %v186 = vld [vmem:[#allocation3 + $0x4] sm:$0xf]
    %v187 = vpack.c.bf16 %v186, %v186
    %v189 = vrot.slane %v187, 2
    %v192 = vsel %vm32, %v187, %v189
    %194 = vrot.lane.b32.xlu0 %v192, 41
    %v195 = vpop.permute.xlu0 %194
    %vm197 = vcmask 853704
    %198 = vst.msk [vmem:[#allocation2 + $0x2] sm:$0x3] %vm197, %v195
    %v199 = vld [vmem:[#allocation3 + $0x4] sm:$0xf]
    %v200 = vpack.c.bf16 %v199, %v199
    %v202 = vrot.slane %v200, 2
    %v205 = vsel %vm32, %v200, %v202
    %207 = vrot.lane.b32.xlu0 %v205, 43
    %v208 = vpop.permute.xlu0 %207
    %vm210 = vcmask 1001304
    %211 = vst.msk [vmem:[#allocation2 + $0x2] sm:$0x3] %vm210, %v208
    %v212 = vld [vmem:[#allocation3 + $0x4] sm:$0xf]
    %v213 = vpack.c.bf16 %v212, %v212
    %v215 = vrot.slane %v213, 2
    %v218 = vsel %vm32, %v213, %v215
    %220 = vrot.lane.b32.xlu0 %v218, 45
    %v221 = vpop.permute.xlu0 %220
    %v222 = vrot.slane %v221, 6
    %vm223 = vcmask 367616
    %v224 = vsel %vm223, %v222, %v221
    %vm226 = vcmask 1042408
    %vm227 = vcmask 101378
    %vm228 = vmor %vm227, %vm226
    %229 = vst.msk [vmem:[#allocation2 + $0x2] sm:$0xf] %vm228, %v224
    %v230 = vld [vmem:[#allocation3 + $0x4] sm:$0xf]
    %v231 = vpack.c.bf16 %v230, %v230
    %v233 = vrot.slane %v231, 2
    %v236 = vsel %vm32, %v231, %v233
    %238 = vrot.lane.b32.xlu0 %v236, 47
    %v239 = vpop.permute.xlu0 %238
    %vm241 = vcmask 246904
    %242 = vst.msk [vmem:[#allocation2 + $0x4] sm:$0x3] %vm241, %v239
    %v243 = vld [vmem:[#allocation3 + $0x4] sm:$0xf]
    %v244 = vpack.c.bf16 %v243, %v243
    %v246 = vrot.slane %v244, 2
    %v249 = vsel %vm32, %v244, %v246
    %251 = vrot.lane.b32.xlu0 %v249, 49
    %v252 = vpop.permute.xlu0 %251
    %vm254 = vcmask 394504
    %255 = vst.msk [vmem:[#allocation2 + $0x4] sm:$0x3] %vm254, %v252
    %v256 = vld [vmem:[%s1] sm:$0xf]
    %v257 = vld [vmem:[#allocation2] sm:$0x3f]
    %v259 = vunpack.c.l.b16 %v256
    %v260 = vpack.c.b16 %v259, %v259
    %261 = vrot.lane.b32.xlu0 %v260, 124
    %v262 = vpop.permute.xlu0 %261
    %264 = vst [vmem:[#allocation1] ss:$4 sm:$0xff] %v257
    %v265 = vld.sshfl [vmem:[#allocation1] sm:$0xff pattern:$0x73625140]
    %v267 = vld.sshfl [vmem:[#allocation1 + $0x8] sm:$0xff pattern:$0x73625140]
    %v269 = vld.sshfl [vmem:[#allocation1 + $0x10] sm:$0xff pattern:$0x73625140]
    %271 = vrot.lane.b32.xlu0 %v265, 127
    %v272 = vpop.permute.xlu0 %271
    %273 = vrot.lane.b32.xlu0 %v267, 127
    %v274 = vpop.permute.xlu0 %273
    %275 = vrot.lane.b32.xlu0 %v269, 127
    %v276 = vpop.permute.xlu0 %275
    %vm277 = vcmask 1039360
    %v278 = vsel %vm277, %v272, %v274
    %v279 = vsel %vm277, %v274, %v276
    %vm280 = vcmask 31744
    %v282 = vsel %vm280, %v262, 0
    %v285 = vsel %vm32, %v278, 0
    %v288 = vsel %vm32, %v279, 0
    %v291 = vsel %vm32, %v276, 0
    %293 = vmatpush.bf16.msra.mxu0 0
    %294 = vmatpush.bf16.msra.mxu0 0
    %295 = vmatpush.bf16.msra.mxu0 0
    %296 = vmatpush.bf16.msra.mxu0 0
    %297 = vmatpush.bf16.msra.mxu0 0
    %298 = vmatpush.bf16.msra.mxu0 0
    %299 = vmatpush.bf16.msra.mxu0 0
    %300 = vmatpush.bf16.msra.mxu0 %v285
    %301 = vmatmul.bf16.gmra.mxu0 %v282
    %v302 = vpop.f32.mrf.mxu0
    %v303 = vadd.f32 0.0, %v302
    %v304 = vpop.f32.mrf.mxu0
    %305 = vdwg.mxu0
    %306 = vmatpush.bf16.msra.mxu0 0
    %307 = vmatpush.bf16.msra.mxu0 0
    %308 = vmatpush.bf16.msra.mxu0 0
    %309 = vmatpush.bf16.msra.mxu0 0
    %310 = vmatpush.bf16.msra.mxu0 0
    %311 = vmatpush.bf16.msra.mxu0 0
    %312 = vmatpush.bf16.msra.mxu0 0
    %313 = vmatpush.bf16.msra.mxu0 %v288
    %314 = vmatmul.bf16.gmra.mxu0 %v282
    %v315 = vpop.f32.mrf.mxu0
    %v316 = vadd.f32 0.0, %v315
    %v317 = vpop.f32.mrf.mxu0
    %318 = vdwg.mxu0
    %319 = vmatpush.bf16.msra.mxu0 0
    %320 = vmatpush.bf16.msra.mxu0 0
    %321 = vmatpush.bf16.msra.mxu0 0
    %322 = vmatpush.bf16.msra.mxu0 0
    %323 = vmatpush.bf16.msra.mxu0 0
    %324 = vmatpush.bf16.msra.mxu0 0
    %325 = vmatpush.bf16.msra.mxu0 0
    %326 = vmatpush.bf16.msra.mxu0 %v291
    %327 = vmatmul.bf16.gmra.mxu0 %v282
    %v328 = vpop.f32.mrf.mxu0
    %v329 = vadd.f32 0.0, %v328
    %v330 = vpop.f32.mrf.mxu0
    %331 = vdwg.mxu0
    %332 = vst [vmem:[#allocation1] ss:$4 sm:$0xff] %v257
    %v333 = vld.sshfl [vmem:[#allocation1] sm:$0xff pattern:$0x73625140]
    %v334 = vld.sshfl [vmem:[#allocation1 + $0x8] sm:$0xff pattern:$0x73625140]
    %v335 = vld.sshfl [vmem:[#allocation1 + $0x10] sm:$0xff pattern:$0x73625140]
    %v337 = vsel %vm280, %v256, 0
    %v339 = vsel %vm32, %v333, 0
    %v341 = vsel %vm32, %v334, 0
    %v343 = vsel %vm32, %v335, 0
    %345 = vmatpush.bf16.msra.mxu0 0
    %346 = vmatpush.bf16.msra.mxu0 0
    %347 = vmatpush.bf16.msra.mxu0 0
    %348 = vmatpush.bf16.msra.mxu0 0
    %349 = vmatpush.bf16.msra.mxu0 0
    %350 = vmatpush.bf16.msra.mxu0 0
    %351 = vmatpush.bf16.msra.mxu0 0
    %352 = vmatpush.bf16.msra.mxu0 %v339
    %353 = vmatmul.bf16.gmra.mxu0 %v337
    %v354 = vpop.f32.mrf.mxu0
    %v355 = vadd.f32 %v303, %v354
    %v356 = vpop.f32.mrf.mxu0
    %357 = vdwg.mxu0
    %358 = vmatpush.bf16.msra.mxu0 0
    %359 = vmatpush.bf16.msra.mxu0 0
    %360 = vmatpush.bf16.msra.mxu0 0
    %361 = vmatpush.bf16.msra.mxu0 0
    %362 = vmatpush.bf16.msra.mxu0 0
    %363 = vmatpush.bf16.msra.mxu0 0
    %364 = vmatpush.bf16.msra.mxu0 0
    %365 = vmatpush.bf16.msra.mxu0 %v341
    %366 = vmatmul.bf16.gmra.mxu0 %v337
    %v367 = vpop.f32.mrf.mxu0
    %v368 = vadd.f32 %v316, %v367
    %v369 = vpop.f32.mrf.mxu0
    %370 = vdwg.mxu0
    %371 = vmatpush.bf16.msra.mxu0 0
    %372 = vmatpush.bf16.msra.mxu0 0
    %373 = vmatpush.bf16.msra.mxu0 0
    %374 = vmatpush.bf16.msra.mxu0 0
    %375 = vmatpush.bf16.msra.mxu0 0
    %376 = vmatpush.bf16.msra.mxu0 0
    %377 = vmatpush.bf16.msra.mxu0 0
    %378 = vmatpush.bf16.msra.mxu0 %v343
    %379 = vmatmul.bf16.gmra.mxu0 %v337
    %v380 = vpop.f32.mrf.mxu0
    %v381 = vadd.f32 %v329, %v380
    %v382 = vpop.f32.mrf.mxu0
    %383 = vdwg.mxu0
    %v384 = vld [vmem:[%s1] sm:$0xf]
    %v385 = vld [vmem:[#allocation2] sm:$0x3f]
    %v387 = vunpack.c.l.b16 %v384
    %v388 = vpack.c.b16 %v387, %v387
    %389 = vrot.lane.b32.xlu0 %v388, 120
    %v390 = vpop.permute.xlu0 %389
    %392 = vst [vmem:[#allocation1] ss:$4 sm:$0xff] %v385
    %v393 = vld.sshfl [vmem:[#allocation1] sm:$0xff pattern:$0x73625140]
    %v395 = vld.sshfl [vmem:[#allocation1 + $0x8] sm:$0xff pattern:$0x73625140]
    %v397 = vld.sshfl [vmem:[#allocation1 + $0x10] sm:$0xff pattern:$0x73625140]
    %399 = vrot.lane.b32.xlu0 %v393, 126
    %v400 = vpop.permute.xlu0 %399
    %401 = vrot.lane.b32.xlu0 %v395, 126
    %v402 = vpop.permute.xlu0 %401
    %403 = vrot.lane.b32.xlu0 %v397, 126
    %v404 = vpop.permute.xlu0 %403
    %vm405 = vcmask 1031168
    %v406 = vsel %vm405, %v400, %v402
    %v407 = vsel %vm405, %v402, %v404
    %v409 = vsel %vm280, %v390, 0
    %v412 = vsel %vm32, %v406, 0
    %v415 = vsel %vm32, %v407, 0
    %v418 = vsel %vm32, %v404, 0
    %420 = vmatpush.bf16.msra.mxu0 0
    %421 = vmatpush.bf16.msra.mxu0 0
    %422 = vmatpush.bf16.msra.mxu0 0
    %423 = vmatpush.bf16.msra.mxu0 0
    %424 = vmatpush.bf16.msra.mxu0 0
    %425 = vmatpush.bf16.msra.mxu0 0
    %426 = vmatpush.bf16.msra.mxu0 0
    %427 = vmatpush.bf16.msra.mxu0 %v412
    %428 = vmatmul.bf16.gmra.mxu0 %v409
    %v429 = vpop.f32.mrf.mxu0
    %v430 = vadd.f32 0.0, %v429
    %v431 = vpop.f32.mrf.mxu0
    %432 = vdwg.mxu0
    %433 = vmatpush.bf16.msra.mxu0 0
    %434 = vmatpush.bf16.msra.mxu0 0
    %435 = vmatpush.bf16.msra.mxu0 0
    %436 = vmatpush.bf16.msra.mxu0 0
    %437 = vmatpush.bf16.msra.mxu0 0
    %438 = vmatpush.bf16.msra.mxu0 0
    %439 = vmatpush.bf16.msra.mxu0 0
    %440 = vmatpush.bf16.msra.mxu0 %v415
    %441 = vmatmul.bf16.gmra.mxu0 %v409
    %v442 = vpop.f32.mrf.mxu0
    %v443 = vadd.f32 0.0, %v442
    %v444 = vpop.f32.mrf.mxu0
    %445 = vdwg.mxu0
    %446 = vmatpush.bf16.msra.mxu0 0
    %447 = vmatpush.bf16.msra.mxu0 0
    %448 = vmatpush.bf16.msra.mxu0 0
    %449 = vmatpush.bf16.msra.mxu0 0
    %450 = vmatpush.bf16.msra.mxu0 0
    %451 = vmatpush.bf16.msra.mxu0 0
    %452 = vmatpush.bf16.msra.mxu0 0
    %453 = vmatpush.bf16.msra.mxu0 %v418
    %454 = vmatmul.bf16.gmra.mxu0 %v409
    %v455 = vpop.f32.mrf.mxu0
    %v456 = vadd.f32 0.0, %v455
    %v457 = vpop.f32.mrf.mxu0
    %458 = vdwg.mxu0
    %v459 = vadd.f32 %v355, %v430
    %v460 = vadd.f32 %v368, %v443
    %v461 = vadd.f32 %v381, %v456
    %v462 = vld [vmem:[%s1] sm:$0xf]
    %v463 = vld [vmem:[#allocation2] sm:$0x3f]
    %v465 = vunpack.c.l.b16 %v462
    %v466 = vpack.c.b16 %v465, %v465
    %467 = vrot.lane.b32.xlu0 %v466, 116
    %v468 = vpop.permute.xlu0 %467
    %470 = vst [vmem:[#allocation1] ss:$4 sm:$0xff] %v463
    %v471 = vld.sshfl [vmem:[#allocation1] sm:$0xff pattern:$0x73625140]
    %v473 = vld.sshfl [vmem:[#allocation1 + $0x8] sm:$0xff pattern:$0x73625140]
    %v475 = vld.sshfl [vmem:[#allocation1 + $0x10] sm:$0xff pattern:$0x73625140]
    %477 = vrot.lane.b32.xlu0 %v471, 110
    %v478 = vpop.permute.xlu0 %477
    %479 = vrot.lane.b32.xlu0 %v473, 110
    %v480 = vpop.permute.xlu0 %479
    %481 = vrot.lane.b32.xlu0 %v475, 110
    %v482 = vpop.permute.xlu0 %481
    %vm483 = vcmask 900096
    %v484 = vsel %vm483, %v478, %v480
    %v485 = vsel %vm483, %v480, %v482
    %v487 = vsel %vm280, %v468, 0
    %v490 = vsel %vm32, %v484, 0
    %v493 = vsel %vm32, %v485, 0
    %v496 = vsel %vm32, %v482, 0
    %498 = vmatpush.bf16.msra.mxu0 0
    %499 = vmatpush.bf16.msra.mxu0 0
    %500 = vmatpush.bf16.msra.mxu0 0
    %501 = vmatpush.bf16.msra.mxu0 0
    %502 = vmatpush.bf16.msra.mxu0 0
    %503 = vmatpush.bf16.msra.mxu0 0
    %504 = vmatpush.bf16.msra.mxu0 0
    %505 = vmatpush.bf16.msra.mxu0 %v490
    %506 = vmatmul.bf16.gmra.mxu0 %v487
    %v507 = vpop.f32.mrf.mxu0
    %v508 = vadd.f32 0.0, %v507
    %v509 = vpop.f32.mrf.mxu0
    %510 = vdwg.mxu0
    %511 = vmatpush.bf16.msra.mxu0 0
    %512 = vmatpush.bf16.msra.mxu0 0
    %513 = vmatpush.bf16.msra.mxu0 0
    %514 = vmatpush.bf16.msra.mxu0 0
    %515 = vmatpush.bf16.msra.mxu0 0
    %516 = vmatpush.bf16.msra.mxu0 0
    %517 = vmatpush.bf16.msra.mxu0 0
    %518 = vmatpush.bf16.msra.mxu0 %v493
    %519 = vmatmul.bf16.gmra.mxu0 %v487
    %v520 = vpop.f32.mrf.mxu0
    %v521 = vadd.f32 0.0, %v520
    %v522 = vpop.f32.mrf.mxu0
    %523 = vdwg.mxu0
    %524 = vmatpush.bf16.msra.mxu0 0
    %525 = vmatpush.bf16.msra.mxu0 0
    %526 = vmatpush.bf16.msra.mxu0 0
    %527 = vmatpush.bf16.msra.mxu0 0
    %528 = vmatpush.bf16.msra.mxu0 0
    %529 = vmatpush.bf16.msra.mxu0 0
    %530 = vmatpush.bf16.msra.mxu0 0
    %531 = vmatpush.bf16.msra.mxu0 %v496
    %532 = vmatmul.bf16.gmra.mxu0 %v487
    %v533 = vpop.f32.mrf.mxu0
    %v534 = vadd.f32 0.0, %v533
    %v535 = vpop.f32.mrf.mxu0
    %536 = vdwg.mxu0
    %v537 = vadd.f32 %v459, %v508
    %v538 = vadd.f32 %v460, %v521
    %v539 = vadd.f32 %v461, %v534
    %v540 = vld [vmem:[%s1] sm:$0xf]
    %v541 = vld [vmem:[#allocation2] sm:$0x3f]
    %v543 = vunpack.c.l.b16 %v540
    %v544 = vpack.c.b16 %v543, %v543
    %545 = vrot.lane.b32.xlu0 %v544, 112
    %v546 = vpop.permute.xlu0 %545
    %548 = vst [vmem:[#allocation1] ss:$4 sm:$0xff] %v541
    %v549 = vld.sshfl [vmem:[#allocation1] sm:$0xff pattern:$0x73625140]
    %v551 = vld.sshfl [vmem:[#allocation1 + $0x8] sm:$0xff pattern:$0x73625140]
    %v553 = vld.sshfl [vmem:[#allocation1 + $0x10] sm:$0xff pattern:$0x73625140]
    %555 = vrot.lane.b32.xlu0 %v549, 109
    %v556 = vpop.permute.xlu0 %555
    %557 = vrot.lane.b32.xlu0 %v551, 109
    %v558 = vpop.permute.xlu0 %557
    %559 = vrot.lane.b32.xlu0 %v553, 109
    %v560 = vpop.permute.xlu0 %559
    %vm561 = vcmask 891904
    %v562 = vsel %vm561, %v556, %v558
    %v563 = vsel %vm561, %v558, %v560
    %v565 = vsel %vm280, %v546, 0
    %v568 = vsel %vm32, %v562, 0
    %v571 = vsel %vm32, %v563, 0
    %v574 = vsel %vm32, %v560, 0
    %576 = vmatpush.bf16.msra.mxu0 0
    %577 = vmatpush.bf16.msra.mxu0 0
    %578 = vmatpush.bf16.msra.mxu0 0
    %579 = vmatpush.bf16.msra.mxu0 0
    %580 = vmatpush.bf16.msra.mxu0 0
    %581 = vmatpush.bf16.msra.mxu0 0
    %582 = vmatpush.bf16.msra.mxu0 0
    %583 = vmatpush.bf16.msra.mxu0 %v568
    %584 = vmatmul.bf16.gmra.mxu0 %v565
    %v585 = vpop.f32.mrf.mxu0
    %v586 = vadd.f32 0.0, %v585
    %v587 = vpop.f32.mrf.mxu0
    %588 = vdwg.mxu0
    %589 = vmatpush.bf16.msra.mxu0 0
    %590 = vmatpush.bf16.msra.mxu0 0
    %591 = vmatpush.bf16.msra.mxu0 0
    %592 = vmatpush.bf16.msra.mxu0 0
    %593 = vmatpush.bf16.msra.mxu0 0
    %594 = vmatpush.bf16.msra.mxu0 0
    %595 = vmatpush.bf16.msra.mxu0 0
    %596 = vmatpush.bf16.msra.mxu0 %v571
    %597 = vmatmul.bf16.gmra.mxu0 %v565
    %v598 = vpop.f32.mrf.mxu0
    %v599 = vadd.f32 0.0, %v598
    %v600 = vpop.f32.mrf.mxu0
    %601 = vdwg.mxu0
    %602 = vmatpush.bf16.msra.mxu0 0
    %603 = vmatpush.bf16.msra.mxu0 0
    %604 = vmatpush.bf16.msra.mxu0 0
    %605 = vmatpush.bf16.msra.mxu0 0
    %606 = vmatpush.bf16.msra.mxu0 0
    %607 = vmatpush.bf16.msra.mxu0 0
    %608 = vmatpush.bf16.msra.mxu0 0
    %609 = vmatpush.bf16.msra.mxu0 %v574
    %610 = vmatmul.bf16.gmra.mxu0 %v565
    %v611 = vpop.f32.mrf.mxu0
    %v612 = vadd.f32 0.0, %v611
    %v613 = vpop.f32.mrf.mxu0
    %614 = vdwg.mxu0
    %v615 = vadd.f32 %v537, %v586
    %v616 = vadd.f32 %v538, %v599
    %v617 = vadd.f32 %v539, %v612
    %v618 = vld [vmem:[%s1] sm:$0xf]
    %v619 = vld [vmem:[#allocation2] sm:$0x3f]
    %v621 = vunpack.c.l.b16 %v618
    %v622 = vpack.c.b16 %v621, %v621
    %623 = vrot.lane.b32.xlu0 %v622, 108
    %v624 = vpop.permute.xlu0 %623
    %626 = vst [vmem:[#allocation1] ss:$4 sm:$0xff] %v619
    %v627 = vld.sshfl [vmem:[#allocation1] sm:$0xff pattern:$0x73625140]
    %v629 = vld.sshfl [vmem:[#allocation1 + $0x8] sm:$0xff pattern:$0x73625140]
    %v631 = vld.sshfl [vmem:[#allocation1 + $0x10] sm:$0xff pattern:$0x73625140]
    %633 = vrot.lane.b32.xlu0 %v627, 108
    %v634 = vpop.permute.xlu0 %633
    %635 = vrot.lane.b32.xlu0 %v629, 108
    %v636 = vpop.permute.xlu0 %635
    %637 = vrot.lane.b32.xlu0 %v631, 108
    %v638 = vpop.permute.xlu0 %637
    %vm639 = vcmask 883712
    %v640 = vsel %vm639, %v634, %v636
    %v641 = vsel %vm639, %v636, %v638
    %v643 = vsel %vm280, %v624, 0
    %v646 = vsel %vm32, %v640, 0
    %v649 = vsel %vm32, %v641, 0
    %v652 = vsel %vm32, %v638, 0
    %654 = vmatpush.bf16.msra.mxu0 0
    %655 = vmatpush.bf16.msra.mxu0 0
    %656 = vmatpush.bf16.msra.mxu0 0
    %657 = vmatpush.bf16.msra.mxu0 0
    %658 = vmatpush.bf16.msra.mxu0 0
    %659 = vmatpush.bf16.msra.mxu0 0
    %660 = vmatpush.bf16.msra.mxu0 0
    %661 = vmatpush.bf16.msra.mxu0 %v646
    %662 = vmatmul.bf16.gmra.mxu0 %v643
    %v663 = vpop.f32.mrf.mxu0
    %v664 = vadd.f32 0.0, %v663
    %v665 = vpop.f32.mrf.mxu0
    %666 = vdwg.mxu0
    %667 = vmatpush.bf16.msra.mxu0 0
    %668 = vmatpush.bf16.msra.mxu0 0
    %669 = vmatpush.bf16.msra.mxu0 0
    %670 = vmatpush.bf16.msra.mxu0 0
    %671 = vmatpush.bf16.msra.mxu0 0
    %672 = vmatpush.bf16.msra.mxu0 0
    %673 = vmatpush.bf16.msra.mxu0 0
    %674 = vmatpush.bf16.msra.mxu0 %v649
    %675 = vmatmul.bf16.gmra.mxu0 %v643
    %v676 = vpop.f32.mrf.mxu0
    %v677 = vadd.f32 0.0, %v676
    %v678 = vpop.f32.mrf.mxu0
    %679 = vdwg.mxu0
    %680 = vmatpush.bf16.msra.mxu0 0
    %681 = vmatpush.bf16.msra.mxu0 0
    %682 = vmatpush.bf16.msra.mxu0 0
    %683 = vmatpush.bf16.msra.mxu0 0
    %684 = vmatpush.bf16.msra.mxu0 0
    %685 = vmatpush.bf16.msra.mxu0 0
    %686 = vmatpush.bf16.msra.mxu0 0
    %687 = vmatpush.bf16.msra.mxu0 %v652
    %688 = vmatmul.bf16.gmra.mxu0 %v643
    %v689 = vpop.f32.mrf.mxu0
    %v690 = vadd.f32 0.0, %v689
    %v691 = vpop.f32.mrf.mxu0
    %692 = vdwg.mxu0
    %v693 = vadd.f32 %v615, %v664
    %v694 = vadd.f32 %v616, %v677
    %v695 = vadd.f32 %v617, %v690
    %v696 = vld [vmem:[%s1] sm:$0xf]
    %v697 = vld [vmem:[#allocation2] sm:$0x3f]
    %v699 = vunpack.c.l.b16 %v696
    %v700 = vpack.c.b16 %v699, %v699
    %701 = vrot.lane.b32.xlu0 %v700, 104
    %v702 = vpop.permute.xlu0 %701
    %704 = vst [vmem:[#allocation1] ss:$4 sm:$0xff] %v697
    %v705 = vld.sshfl [vmem:[#allocation1] sm:$0xff pattern:$0x73625140]
    %v707 = vld.sshfl [vmem:[#allocation1 + $0x8] sm:$0xff pattern:$0x73625140]
    %v709 = vld.sshfl [vmem:[#allocation1 + $0x10] sm:$0xff pattern:$0x73625140]
    %711 = vrot.lane.b32.xlu0 %v705, 92
    %v712 = vpop.permute.xlu0 %711
    %713 = vrot.lane.b32.xlu0 %v707, 92
    %v714 = vpop.permute.xlu0 %713
    %715 = vrot.lane.b32.xlu0 %v709, 92
    %v716 = vpop.permute.xlu0 %715
    %vm717 = vcmask 752640
    %v718 = vsel %vm717, %v712, %v714
    %v719 = vsel %vm717, %v714, %v716
    %v721 = vsel %vm280, %v702, 0
    %v724 = vsel %vm32, %v718, 0
    %v727 = vsel %vm32, %v719, 0
    %v730 = vsel %vm32, %v716, 0
    %732 = vmatpush.bf16.msra.mxu0 0
    %733 = vmatpush.bf16.msra.mxu0 0
    %734 = vmatpush.bf16.msra.mxu0 0
    %735 = vmatpush.bf16.msra.mxu0 0
    %736 = vmatpush.bf16.msra.mxu0 0
    %737 = vmatpush.bf16.msra.mxu0 0
    %738 = vmatpush.bf16.msra.mxu0 0
    %739 = vmatpush.bf16.msra.mxu0 %v724
    %740 = vmatmul.bf16.gmra.mxu0 %v721
    %v741 = vpop.f32.mrf.mxu0
    %v742 = vadd.f32 0.0, %v741
    %v743 = vpop.f32.mrf.mxu0
    %744 = vdwg.mxu0
    %745 = vmatpush.bf16.msra.mxu0 0
    %746 = vmatpush.bf16.msra.mxu0 0
    %747 = vmatpush.bf16.msra.mxu0 0
    %748 = vmatpush.bf16.msra.mxu0 0
    %749 = vmatpush.bf16.msra.mxu0 0
    %750 = vmatpush.bf16.msra.mxu0 0
    %751 = vmatpush.bf16.msra.mxu0 0
    %752 = vmatpush.bf16.msra.mxu0 %v727
    %753 = vmatmul.bf16.gmra.mxu0 %v721
    %v754 = vpop.f32.mrf.mxu0
    %v755 = vadd.f32 0.0, %v754
    %v756 = vpop.f32.mrf.mxu0
    %757 = vdwg.mxu0
    %758 = vmatpush.bf16.msra.mxu0 0
    %759 = vmatpush.bf16.msra.mxu0 0
    %760 = vmatpush.bf16.msra.mxu0 0
    %761 = vmatpush.bf16.msra.mxu0 0
    %762 = vmatpush.bf16.msra.mxu0 0
    %763 = vmatpush.bf16.msra.mxu0 0
    %764 = vmatpush.bf16.msra.mxu0 0
    %765 = vmatpush.bf16.msra.mxu0 %v730
    %766 = vmatmul.bf16.gmra.mxu0 %v721
    %v767 = vpop.f32.mrf.mxu0
    %v768 = vadd.f32 0.0, %v767
    %v769 = vpop.f32.mrf.mxu0
    %770 = vdwg.mxu0
    %v771 = vadd.f32 %v693, %v742
    %v772 = vadd.f32 %v694, %v755
    %v773 = vadd.f32 %v695, %v768
    %v774 = vld [vmem:[%s1] sm:$0xf]
    %v775 = vld [vmem:[#allocation2] sm:$0x3f]
    %v777 = vunpack.c.l.b16 %v774
    %v778 = vpack.c.b16 %v777, %v777
    %779 = vrot.lane.b32.xlu0 %v778, 100
    %v780 = vpop.permute.xlu0 %779
    %782 = vst [vmem:[#allocation1] ss:$4 sm:$0xff] %v775
    %v783 = vld.sshfl [vmem:[#allocation1] sm:$0xff pattern:$0x73625140]
    %v785 = vld.sshfl [vmem:[#allocation1 + $0x8] sm:$0xff pattern:$0x73625140]
    %v787 = vld.sshfl [vmem:[#allocation1 + $0x10] sm:$0xff pattern:$0x73625140]
    %789 = vrot.lane.b32.xlu0 %v783, 91
    %v790 = vpop.permute.xlu0 %789
    %791 = vrot.lane.b32.xlu0 %v785, 91
    %v792 = vpop.permute.xlu0 %791
    %793 = vrot.lane.b32.xlu0 %v787, 91
    %v794 = vpop.permute.xlu0 %793
    %vm795 = vcmask 744448
    %v796 = vsel %vm795, %v790, %v792
    %v797 = vsel %vm795, %v792, %v794
    %v799 = vsel %vm280, %v780, 0
    %v802 = vsel %vm32, %v796, 0
    %v805 = vsel %vm32, %v797, 0
    %v808 = vsel %vm32, %v794, 0
    %810 = vmatpush.bf16.msra.mxu0 0
    %811 = vmatpush.bf16.msra.mxu0 0
    %812 = vmatpush.bf16.msra.mxu0 0
    %813 = vmatpush.bf16.msra.mxu0 0
    %814 = vmatpush.bf16.msra.mxu0 0
    %815 = vmatpush.bf16.msra.mxu0 0
    %816 = vmatpush.bf16.msra.mxu0 0
    %817 = vmatpush.bf16.msra.mxu0 %v802
    %818 = vmatmul.bf16.gmra.mxu0 %v799
    %v819 = vpop.f32.mrf.mxu0
    %v820 = vadd.f32 0.0, %v819
    %v821 = vpop.f32.mrf.mxu0
    %822 = vdwg.mxu0
    %823 = vmatpush.bf16.msra.mxu0 0
    %824 = vmatpush.bf16.msra.mxu0 0
    %825 = vmatpush.bf16.msra.mxu0 0
    %826 = vmatpush.bf16.msra.mxu0 0
    %827 = vmatpush.bf16.msra.mxu0 0
    %828 = vmatpush.bf16.msra.mxu0 0
    %829 = vmatpush.bf16.msra.mxu0 0
    %830 = vmatpush.bf16.msra.mxu0 %v805
    %831 = vmatmul.bf16.gmra.mxu0 %v799
    %v832 = vpop.f32.mrf.mxu0
    %v833 = vadd.f32 0.0, %v832
    %v834 = vpop.f32.mrf.mxu0
    %835 = vdwg.mxu0
    %836 = vmatpush.bf16.msra.mxu0 0
    %837 = vmatpush.bf16.msra.mxu0 0
    %838 = vmatpush.bf16.msra.mxu0 0
    %839 = vmatpush.bf16.msra.mxu0 0
    %840 = vmatpush.bf16.msra.mxu0 0
    %841 = vmatpush.bf16.msra.mxu0 0
    %842 = vmatpush.bf16.msra.mxu0 0
    %843 = vmatpush.bf16.msra.mxu0 %v808
    %844 = vmatmul.bf16.gmra.mxu0 %v799
    %v845 = vpop.f32.mrf.mxu0
    %v846 = vadd.f32 0.0, %v845
    %v847 = vpop.f32.mrf.mxu0
    %848 = vdwg.mxu0
    %v849 = vadd.f32 %v771, %v820
    %v850 = vadd.f32 %v772, %v833
    %v851 = vadd.f32 %v773, %v846
    %v852 = vld [vmem:[%s1] sm:$0xf]
    %v853 = vld [vmem:[#allocation2] sm:$0x3f]
    %v855 = vunpack.c.l.b16 %v852
    %v856 = vpack.c.b16 %v855, %v855
    %857 = vrot.lane.b32.xlu0 %v856, 96
    %v858 = vpop.permute.xlu0 %857
    %860 = vst [vmem:[#allocation1] ss:$4 sm:$0xff] %v853
    %v861 = vld.sshfl [vmem:[#allocation1] sm:$0xff pattern:$0x73625140]
    %v863 = vld.sshfl [vmem:[#allocation1 + $0x8] sm:$0xff pattern:$0x73625140]
    %v865 = vld.sshfl [vmem:[#allocation1 + $0x10] sm:$0xff pattern:$0x73625140]
    %867 = vrot.lane.b32.xlu0 %v861, 90
    %v868 = vpop.permute.xlu0 %867
    %869 = vrot.lane.b32.xlu0 %v863, 90
    %v870 = vpop.permute.xlu0 %869
    %871 = vrot.lane.b32.xlu0 %v865, 90
    %v872 = vpop.permute.xlu0 %871
    %vm873 = vcmask 736256
    %v874 = vsel %vm873, %v868, %v870
    %v875 = vsel %vm873, %v870, %v872
    %v877 = vsel %vm280, %v858, 0
    %v880 = vsel %vm32, %v874, 0
    %v883 = vsel %vm32, %v875, 0
    %v886 = vsel %vm32, %v872, 0
    %888 = vmatpush.bf16.msra.mxu0 0
    %889 = vmatpush.bf16.msra.mxu0 0
    %890 = vmatpush.bf16.msra.mxu0 0
    %891 = vmatpush.bf16.msra.mxu0 0
    %892 = vmatpush.bf16.msra.mxu0 0
    %893 = vmatpush.bf16.msra.mxu0 0
    %894 = vmatpush.bf16.msra.mxu0 0
    %895 = vmatpush.bf16.msra.mxu0 %v880
    %896 = vmatmul.bf16.gmra.mxu0 %v877
    %v897 = vpop.f32.mrf.mxu0
    %v898 = vadd.f32 0.0, %v897
    %v899 = vpop.f32.mrf.mxu0
    %900 = vdwg.mxu0
    %901 = vmatpush.bf16.msra.mxu0 0
    %902 = vmatpush.bf16.msra.mxu0 0
    %903 = vmatpush.bf16.msra.mxu0 0
    %904 = vmatpush.bf16.msra.mxu0 0
    %905 = vmatpush.bf16.msra.mxu0 0
    %906 = vmatpush.bf16.msra.mxu0 0
    %907 = vmatpush.bf16.msra.mxu0 0
    %908 = vmatpush.bf16.msra.mxu0 %v883
    %909 = vmatmul.bf16.gmra.mxu0 %v877
    %v910 = vpop.f32.mrf.mxu0
    %v911 = vadd.f32 0.0, %v910
    %v912 = vpop.f32.mrf.mxu0
    %913 = vdwg.mxu0
    %914 = vmatpush.bf16.msra.mxu0 0
    %915 = vmatpush.bf16.msra.mxu0 0
    %916 = vmatpush.bf16.msra.mxu0 0
    %917 = vmatpush.bf16.msra.mxu0 0
    %918 = vmatpush.bf16.msra.mxu0 0
    %919 = vmatpush.bf16.msra.mxu0 0
    %920 = vmatpush.bf16.msra.mxu0 0
    %921 = vmatpush.bf16.msra.mxu0 %v886
    %922 = vmatmul.bf16.gmra.mxu0 %v877
    %v923 = vpop.f32.mrf.mxu0
    %v924 = vadd.f32 0.0, %v923
    %v925 = vpop.f32.mrf.mxu0
    %926 = vdwg.mxu0
    %v927 = vadd.f32 %v849, %v898
    %v928 = vadd.f32 %v850, %v911
    %v929 = vadd.f32 %v851, %v924
    %v930 = vld [vmem:[%s2] sm:$0xff]
    %932 = vset.pattern.permute.xlu0 0
    %933 = vperm.xlu0 %932, %v930
    %v934 = vpop.permute.xlu0 %933
    %v936 = vadd.f32 %v927, %v934
    %v937 = vadd.f32 %v928, %v934
    %v938 = vadd.f32 %v929, %v934
    %v939 = vmax.f32 %v936, 0.0
    %v940 = vmax.f32 %v937, 0.0
    %v941 = vmax.f32 %v938, 0.0
    %vm942 = vcmask 130048
    %943 = vst.msk [vmem:[#allocation6] sm:$0xff] %vm942, %v939
    %945 = vrot.lane.b32.xlu0 %v939, 126
    %v946 = vpop.permute.xlu0 %945
    %vm948 = vcmask 261248
    %949 = vst.msk [vmem:[#allocation6] sm:$0xff] %vm948, %v946
    %950 = vrot.lane.b32.xlu0 %v939, 124
    %v951 = vpop.permute.xlu0 %950
    %vm953 = vcmask 392448
    %954 = vst.msk [vmem:[#allocation6] sm:$0xff] %vm953, %v951
    %955 = vrot.lane.b32.xlu0 %v939, 122
    %v956 = vpop.permute.xlu0 %955
    %vm958 = vcmask 523648
    %959 = vst.msk [vmem:[#allocation6] sm:$0xff] %vm958, %v956
    %960 = vrot.lane.b32.xlu0 %v939, 120
    %v961 = vpop.permute.xlu0 %960
    %vm963 = vcmask 654848
    %964 = vst.msk [vmem:[#allocation6] sm:$0xff] %vm963, %v961
    %965 = vrot.lane.b32.xlu0 %v939, 118
    %v966 = vpop.permute.xlu0 %965
    %vm968 = vcmask 786048
    %969 = vst.msk [vmem:[#allocation6] sm:$0xff] %vm968, %v966
    %970 = vrot.lane.b32.xlu0 %v939, 116
    %v971 = vpop.permute.xlu0 %970
    %vm973 = vcmask 917248
    %974 = vst.msk [vmem:[#allocation6] sm:$0xff] %vm973, %v971
    %976 = vrot.lane.b32.xlu0 %v939, 114
    %v977 = vpop.permute.xlu0 %976
    %978 = vrot.lane.b32.xlu0 %v940, 114
    %v979 = vpop.permute.xlu0 %978
    %vm980 = vcmask 932864
    %v981 = vsel %vm980, %v977, %v979
    %vm983 = vcmask 1048448
    %984 = vst.msk [vmem:[#allocation6] sm:$0xff] %vm983, %v981
    %985 = vrot.lane.b32.xlu0 %v940, 112
    %v986 = vpop.permute.xlu0 %985
    %988 = vst.msk [vmem:[#allocation6 + $0x8] sm:$0xff] %vm942, %v986
    %989 = vrot.lane.b32.xlu0 %v940, 110
    %v990 = vpop.permute.xlu0 %989
    %992 = vst.msk [vmem:[#allocation6 + $0x8] sm:$0xff] %vm948, %v990
    %993 = vrot.lane.b32.xlu0 %v940, 108
    %v994 = vpop.permute.xlu0 %993
    %996 = vst.msk [vmem:[#allocation6 + $0x8] sm:$0xff] %vm953, %v994
    %997 = vrot.lane.b32.xlu0 %v940, 106
    %v998 = vpop.permute.xlu0 %997
    %1000 = vst.msk [vmem:[#allocation6 + $0x8] sm:$0xff] %vm958, %v998
    %1001 = vrot.lane.b32.xlu0 %v940, 104
    %v1002 = vpop.permute.xlu0 %1001
    %1004 = vst.msk [vmem:[#allocation6 + $0x8] sm:$0xff] %vm963, %v1002
    %1005 = vrot.lane.b32.xlu0 %v940, 102
    %v1006 = vpop.permute.xlu0 %1005
    %1008 = vst.msk [vmem:[#allocation6 + $0x8] sm:$0xff] %vm968, %v1006
    %1010 = vrot.lane.b32.xlu0 %v940, 100
    %v1011 = vpop.permute.xlu0 %1010
    %1012 = vrot.lane.b32.xlu0 %v941, 100
    %v1013 = vpop.permute.xlu0 %1012
    %vm1014 = vcmask 818176
    %v1015 = vsel %vm1014, %v1011, %v1013
    %1017 = vst.msk [vmem:[#allocation6 + $0x8] sm:$0xff] %vm973, %v1015
    %1018 = vrot.lane.b32.xlu0 %v941, 98
    %v1019 = vpop.permute.xlu0 %1018
    %1021 = vst.msk [vmem:[#allocation6 + $0x8] sm:$0xff] %vm983, %v1019
    %s1022 = scalar_lea.vmem [#allocation3], 8
    %v1023 = vld [vmem:[%s1022] sm:$0xf]
    %v1024 = vpack.c.bf16 %v1023, %v1023
    %v1026 = vrot.slane %v1024, 2
    %v1029 = vsel %vm32, %v1024, %v1026
    %1031 = vrot.lane.b32.xlu0 %v1029, 19
    %v1032 = vpop.permute.xlu0 %1031
    %1034 = vst.msk [vmem:[#allocation2] sm:$0x3] %vm49, %v1032
    %v1035 = vld [vmem:[%s1022] sm:$0xf]
    %v1036 = vpack.c.bf16 %v1035, %v1035
    %v1038 = vrot.slane %v1036, 2
    %v1041 = vsel %vm32, %v1036, %v1038
    %1043 = vrot.lane.b32.xlu0 %v1041, 21
    %v1044 = vpop.permute.xlu0 %1043
    %1046 = vst.msk [vmem:[#allocation2] sm:$0x3] %vm62, %v1044
    %v1047 = vld [vmem:[%s1022] sm:$0xf]
    %v1048 = vpack.c.bf16 %v1047, %v1047
    %v1050 = vrot.slane %v1048, 2
    %v1053 = vsel %vm32, %v1048, %v1050
    %1055 = vrot.lane.b32.xlu0 %v1053, 23
    %v1056 = vpop.permute.xlu0 %1055
    %1058 = vst.msk [vmem:[#allocation2] sm:$0x3] %vm75, %v1056
    %v1059 = vld [vmem:[%s1022] sm:$0xf]
    %v1060 = vpack.c.bf16 %v1059, %v1059
    %v1062 = vrot.slane %v1060, 2
    %v1065 = vsel %vm32, %v1060, %v1062
    %1067 = vrot.lane.b32.xlu0 %v1065, 25
    %v1068 = vpop.permute.xlu0 %1067
    %1070 = vst.msk [vmem:[#allocation2] sm:$0x3] %vm88, %v1068
    %v1071 = vld [vmem:[%s1022] sm:$0xf]
    %v1072 = vpack.c.bf16 %v1071, %v1071
    %v1074 = vrot.slane %v1072, 2
    %v1077 = vsel %vm32, %v1072, %v1074
    %1079 = vrot.lane.b32.xlu0 %v1077, 27
    %v1080 = vpop.permute.xlu0 %1079
    %1082 = vst.msk [vmem:[#allocation2] sm:$0x3] %vm101, %v1080
    %v1083 = vld [vmem:[%s1022] sm:$0xf]
    %v1084 = vpack.c.bf16 %v1083, %v1083
    %v1086 = vrot.slane %v1084, 2
    %v1089 = vsel %vm32, %v1084, %v1086
    %1091 = vrot.lane.b32.xlu0 %v1089, 29
    %v1092 = vpop.permute.xlu0 %1091
    %1094 = vst.msk [vmem:[#allocation2] sm:$0x3] %vm114, %v1092
    %v1095 = vld [vmem:[%s1022] sm:$0xf]
    %v1096 = vpack.c.bf16 %v1095, %v1095
    %v1098 = vrot.slane %v1096, 2
    %v1101 = vsel %vm32, %v1096, %v1098
    %1103 = vrot.lane.b32.xlu0 %v1101, 31
    %v1104 = vpop.permute.xlu0 %1103
    %v1105 = vrot.slane %v1104, 6
    %v1106 = vsel %vm127, %v1105, %v1104
    %1108 = vst.msk [vmem:[#allocation2] sm:$0xf] %vm132, %v1106
    %v1109 = vld [vmem:[%s1022] sm:$0xf]
    %v1110 = vpack.c.bf16 %v1109, %v1109
    %v1112 = vrot.slane %v1110, 2
    %v1115 = vsel %vm32, %v1110, %v1112
    %1117 = vrot.lane.b32.xlu0 %v1115, 33
    %v1118 = vpop.permute.xlu0 %1117
    %1120 = vst.msk [vmem:[#allocation2 + $0x2] sm:$0x3] %vm145, %v1118
    %v1121 = vld [vmem:[%s1022 + $0x4] sm:$0xf]
    %v1122 = vpack.c.bf16 %v1121, %v1121
    %v1124 = vrot.slane %v1122, 2
    %v1127 = vsel %vm32, %v1122, %v1124
    %1129 = vrot.lane.b32.xlu0 %v1127, 35
    %v1130 = vpop.permute.xlu0 %1129
    %1132 = vst.msk [vmem:[#allocation2 + $0x2] sm:$0x3] %vm158, %v1130
    %v1133 = vld [vmem:[%s1022 + $0x4] sm:$0xf]
    %v1134 = vpack.c.bf16 %v1133, %v1133
    %v1136 = vrot.slane %v1134, 2
    %v1139 = vsel %vm32, %v1134, %v1136
    %1141 = vrot.lane.b32.xlu0 %v1139, 37
    %v1142 = vpop.permute.xlu0 %1141
    %1144 = vst.msk [vmem:[#allocation2 + $0x2] sm:$0x3] %vm171, %v1142
    %v1145 = vld [vmem:[%s1022 + $0x4] sm:$0xf]
    %v1146 = vpack.c.bf16 %v1145, %v1145
    %v1148 = vrot.slane %v1146, 2
    %v1151 = vsel %vm32, %v1146, %v1148
    %1153 = vrot.lane.b32.xlu0 %v1151, 39
    %v1154 = vpop.permute.xlu0 %1153
    %1156 = vst.msk [vmem:[#allocation2 + $0x2] sm:$0x3] %vm184, %v1154
    %v1157 = vld [vmem:[%s1022 + $0x4] sm:$0xf]
    %v1158 = vpack.c.bf16 %v1157, %v1157
    %v1160 = vrot.slane %v1158, 2
    %v1163 = vsel %vm32, %v1158, %v1160
    %1165 = vrot.lane.b32.xlu0 %v1163, 41
    %v1166 = vpop.permute.xlu0 %1165
    %1168 = vst.msk [vmem:[#allocation2 + $0x2] sm:$0x3] %vm197, %v1166
    %v1169 = vld [vmem:[%s1022 + $0x4] sm:$0xf]
    %v1170 = vpack.c.bf16 %v1169, %v1169
    %v1172 = vrot.slane %v1170, 2
    %v1175 = vsel %vm32, %v1170, %v1172
    %1177 = vrot.lane.b32.xlu0 %v1175, 43
    %v1178 = vpop.permute.xlu0 %1177
    %1180 = vst.msk [vmem:[#allocation2 + $0x2] sm:$0x3] %vm210, %v1178
    %v1181 = vld [vmem:[%s1022 + $0x4] sm:$0xf]
    %v1182 = vpack.c.bf16 %v1181, %v1181
    %v1184 = vrot.slane %v1182, 2
    %v1187 = vsel %vm32, %v1182, %v1184
    %1189 = vrot.lane.b32.xlu0 %v1187, 45
    %v1190 = vpop.permute.xlu0 %1189
    %v1191 = vrot.slane %v1190, 6
    %v1192 = vsel %vm223, %v1191, %v1190
    %1194 = vst.msk [vmem:[#allocation2 + $0x2] sm:$0xf] %vm228, %v1192
    %v1195 = vld [vmem:[%s1022 + $0x4] sm:$0xf]
    %v1196 = vpack.c.bf16 %v1195, %v1195
    %v1198 = vrot.slane %v1196, 2
    %v1201 = vsel %vm32, %v1196, %v1198
    %1203 = vrot.lane.b32.xlu0 %v1201, 47
    %v1204 = vpop.permute.xlu0 %1203
    %1206 = vst.msk [vmem:[#allocation2 + $0x4] sm:$0x3] %vm241, %v1204
    %v1207 = vld [vmem:[%s1022 + $0x4] sm:$0xf]
    %v1208 = vpack.c.bf16 %v1207, %v1207
    %v1210 = vrot.slane %v1208, 2
    %v1213 = vsel %vm32, %v1208, %v1210
    %1215 = vrot.lane.b32.xlu0 %v1213, 49
    %v1216 = vpop.permute.xlu0 %1215
    %1218 = vst.msk [vmem:[#allocation2 + $0x4] sm:$0x3] %vm254, %v1216
    %v1219 = vld [vmem:[%s1] sm:$0xf]
    %v1220 = vld [vmem:[#allocation2] sm:$0x3f]
    %v1222 = vunpack.c.l.b16 %v1219
    %v1223 = vpack.c.b16 %v1222, %v1222
    %1224 = vrot.lane.b32.xlu0 %v1223, 124
    %v1225 = vpop.permute.xlu0 %1224
    %1227 = vst [vmem:[#allocation1] ss:$4 sm:$0xff] %v1220
    %v1228 = vld.sshfl [vmem:[#allocation1] sm:$0xff pattern:$0x73625140]
    %v1230 = vld.sshfl [vmem:[#allocation1 + $0x8] sm:$0xff pattern:$0x73625140]
    %v1232 = vld.sshfl [vmem:[#allocation1 + $0x10] sm:$0xff pattern:$0x73625140]
    %1234 = vrot.lane.b32.xlu0 %v1228, 127
    %v1235 = vpop.permute.xlu0 %1234
    %1236 = vrot.lane.b32.xlu0 %v1230, 127
    %v1237 = vpop.permute.xlu0 %1236
    %1238 = vrot.lane.b32.xlu0 %v1232, 127
    %v1239 = vpop.permute.xlu0 %1238
    %v1240 = vsel %vm277, %v1235, %v1237
    %v1241 = vsel %vm277, %v1237, %v1239
    %v1243 = vsel %vm280, %v1225, 0
    %v1246 = vsel %vm32, %v1240, 0
    %v1249 = vsel %vm32, %v1241, 0
    %v1252 = vsel %vm32, %v1239, 0
    %1254 = vmatpush.bf16.msra.mxu0 0
    %1255 = vmatpush.bf16.msra.mxu0 0
    %1256 = vmatpush.bf16.msra.mxu0 0
    %1257 = vmatpush.bf16.msra.mxu0 0
    %1258 = vmatpush.bf16.msra.mxu0 0
    %1259 = vmatpush.bf16.msra.mxu0 0
    %1260 = vmatpush.bf16.msra.mxu0 0
    %1261 = vmatpush.bf16.msra.mxu0 %v1246
    %1262 = vmatmul.bf16.gmra.mxu0 %v1243
    %v1263 = vpop.f32.mrf.mxu0
    %v1264 = vadd.f32 0.0, %v1263
    %v1265 = vpop.f32.mrf.mxu0
    %1266 = vdwg.mxu0
    %1267 = vmatpush.bf16.msra.mxu0 0
    %1268 = vmatpush.bf16.msra.mxu0 0
    %1269 = vmatpush.bf16.msra.mxu0 0
    %1270 = vmatpush.bf16.msra.mxu0 0
    %1271 = vmatpush.bf16.msra.mxu0 0
    %1272 = vmatpush.bf16.msra.mxu0 0
    %1273 = vmatpush.bf16.msra.mxu0 0
    %1274 = vmatpush.bf16.msra.mxu0 %v1249
    %1275 = vmatmul.bf16.gmra.mxu0 %v1243
    %v1276 = vpop.f32.mrf.mxu0
    %v1277 = vadd.f32 0.0, %v1276
    %v1278 = vpop.f32.mrf.mxu0
    %1279 = vdwg.mxu0
    %1280 = vmatpush.bf16.msra.mxu0 0
    %1281 = vmatpush.bf16.msra.mxu0 0
    %1282 = vmatpush.bf16.msra.mxu0 0
    %1283 = vmatpush.bf16.msra.mxu0 0
    %1284 = vmatpush.bf16.msra.mxu0 0
    %1285 = vmatpush.bf16.msra.mxu0 0
    %1286 = vmatpush.bf16.msra.mxu0 0
    %1287 = vmatpush.bf16.msra.mxu0 %v1252
    %1288 = vmatmul.bf16.gmra.mxu0 %v1243
    %v1289 = vpop.f32.mrf.mxu0
    %v1290 = vadd.f32 0.0, %v1289
    %v1291 = vpop.f32.mrf.mxu0
    %1292 = vdwg.mxu0
    %1293 = vst [vmem:[#allocation1] ss:$4 sm:$0xff] %v1220
    %v1294 = vld.sshfl [vmem:[#allocation1] sm:$0xff pattern:$0x73625140]
    %v1295 = vld.sshfl [vmem:[#allocation1 + $0x8] sm:$0xff pattern:$0x73625140]
    %v1296 = vld.sshfl [vmem:[#allocation1 + $0x10] sm:$0xff pattern:$0x73625140]
    %v1298 = vsel %vm280, %v1219, 0
    %v1300 = vsel %vm32, %v1294, 0
    %v1302 = vsel %vm32, %v1295, 0
    %v1304 = vsel %vm32, %v1296, 0
    %1306 = vmatpush.bf16.msra.mxu0 0
    %1307 = vmatpush.bf16.msra.mxu0 0
    %1308 = vmatpush.bf16.msra.mxu0 0
    %1309 = vmatpush.bf16.msra.mxu0 0
    %1310 = vmatpush.bf16.msra.mxu0 0
    %1311 = vmatpush.bf16.msra.mxu0 0
    %1312 = vmatpush.bf16.msra.mxu0 0
    %1313 = vmatpush.bf16.msra.mxu0 %v1300
    %1314 = vmatmul.bf16.gmra.mxu0 %v1298
    %v1315 = vpop.f32.mrf.mxu0
    %v1316 = vadd.f32 %v1264, %v1315
    %v1317 = vpop.f32.mrf.mxu0
    %1318 = vdwg.mxu0
    %1319 = vmatpush.bf16.msra.mxu0 0
    %1320 = vmatpush.bf16.msra.mxu0 0
    %1321 = vmatpush.bf16.msra.mxu0 0
    %1322 = vmatpush.bf16.msra.mxu0 0
    %1323 = vmatpush.bf16.msra.mxu0 0
    %1324 = vmatpush.bf16.msra.mxu0 0
    %1325 = vmatpush.bf16.msra.mxu0 0
    %1326 = vmatpush.bf16.msra.mxu0 %v1302
    %1327 = vmatmul.bf16.gmra.mxu0 %v1298
    %v1328 = vpop.f32.mrf.mxu0
    %v1329 = vadd.f32 %v1277, %v1328
    %v1330 = vpop.f32.mrf.mxu0
    %1331 = vdwg.mxu0
    %1332 = vmatpush.bf16.msra.mxu0 0
    %1333 = vmatpush.bf16.msra.mxu0 0
    %1334 = vmatpush.bf16.msra.mxu0 0
    %1335 = vmatpush.bf16.msra.mxu0 0
    %1336 = vmatpush.bf16.msra.mxu0 0
    %1337 = vmatpush.bf16.msra.mxu0 0
    %1338 = vmatpush.bf16.msra.mxu0 0
    %1339 = vmatpush.bf16.msra.mxu0 %v1304
    %1340 = vmatmul.bf16.gmra.mxu0 %v1298
    %v1341 = vpop.f32.mrf.mxu0
    %v1342 = vadd.f32 %v1290, %v1341
    %v1343 = vpop.f32.mrf.mxu0
    %1344 = vdwg.mxu0
    %v1345 = vld [vmem:[%s1] sm:$0xf]
    %v1346 = vld [vmem:[#allocation2] sm:$0x3f]
    %v1348 = vunpack.c.l.b16 %v1345
    %v1349 = vpack.c.b16 %v1348, %v1348
    %1350 = vrot.lane.b32.xlu0 %v1349, 120
    %v1351 = vpop.permute.xlu0 %1350
    %1353 = vst [vmem:[#allocation1] ss:$4 sm:$0xff] %v1346
    %v1354 = vld.sshfl [vmem:[#allocation1] sm:$0xff pattern:$0x73625140]
    %v1356 = vld.sshfl [vmem:[#allocation1 + $0x8] sm:$0xff pattern:$0x73625140]
    %v1358 = vld.sshfl [vmem:[#allocation1 + $0x10] sm:$0xff pattern:$0x73625140]
    %1360 = vrot.lane.b32.xlu0 %v1354, 126
    %v1361 = vpop.permute.xlu0 %1360
    %1362 = vrot.lane.b32.xlu0 %v1356, 126
    %v1363 = vpop.permute.xlu0 %1362
    %1364 = vrot.lane.b32.xlu0 %v1358, 126
    %v1365 = vpop.permute.xlu0 %1364
    %v1366 = vsel %vm405, %v1361, %v1363
    %v1367 = vsel %vm405, %v1363, %v1365
    %v1369 = vsel %vm280, %v1351, 0
    %v1372 = vsel %vm32, %v1366, 0
    %v1375 = vsel %vm32, %v1367, 0
    %v1378 = vsel %vm32, %v1365, 0
    %1380 = vmatpush.bf16.msra.mxu0 0
    %1381 = vmatpush.bf16.msra.mxu0 0
    %1382 = vmatpush.bf16.msra.mxu0 0
    %1383 = vmatpush.bf16.msra.mxu0 0
    %1384 = vmatpush.bf16.msra.mxu0 0
    %1385 = vmatpush.bf16.msra.mxu0 0
    %1386 = vmatpush.bf16.msra.mxu0 0
    %1387 = vmatpush.bf16.msra.mxu0 %v1372
    %1388 = vmatmul.bf16.gmra.mxu0 %v1369
    %v1389 = vpop.f32.mrf.mxu0
    %v1390 = vadd.f32 0.0, %v1389
    %v1391 = vpop.f32.mrf.mxu0
    %1392 = vdwg.mxu0
    %1393 = vmatpush.bf16.msra.mxu0 0
    %1394 = vmatpush.bf16.msra.mxu0 0
    %1395 = vmatpush.bf16.msra.mxu0 0
    %1396 = vmatpush.bf16.msra.mxu0 0
    %1397 = vmatpush.bf16.msra.mxu0 0
    %1398 = vmatpush.bf16.msra.mxu0 0
    %1399 = vmatpush.bf16.msra.mxu0 0
    %1400 = vmatpush.bf16.msra.mxu0 %v1375
    %1401 = vmatmul.bf16.gmra.mxu0 %v1369
    %v1402 = vpop.f32.mrf.mxu0
    %v1403 = vadd.f32 0.0, %v1402
    %v1404 = vpop.f32.mrf.mxu0
    %1405 = vdwg.mxu0
    %1406 = vmatpush.bf16.msra.mxu0 0
    %1407 = vmatpush.bf16.msra.mxu0 0
    %1408 = vmatpush.bf16.msra.mxu0 0
    %1409 = vmatpush.bf16.msra.mxu0 0
    %1410 = vmatpush.bf16.msra.mxu0 0
    %1411 = vmatpush.bf16.msra.mxu0 0
    %1412 = vmatpush.bf16.msra.mxu0 0
    %1413 = vmatpush.bf16.msra.mxu0 %v1378
    %1414 = vmatmul.bf16.gmra.mxu0 %v1369
    %v1415 = vpop.f32.mrf.mxu0
    %v1416 = vadd.f32 0.0, %v1415
    %v1417 = vpop.f32.mrf.mxu0
    %1418 = vdwg.mxu0
    %v1419 = vadd.f32 %v1316, %v1390
    %v1420 = vadd.f32 %v1329, %v1403
    %v1421 = vadd.f32 %v1342, %v1416
    %v1422 = vld [vmem:[%s1] sm:$0xf]
    %v1423 = vld [vmem:[#allocation2] sm:$0x3f]
    %v1425 = vunpack.c.l.b16 %v1422
    %v1426 = vpack.c.b16 %v1425, %v1425
    %1427 = vrot.lane.b32.xlu0 %v1426, 116
    %v1428 = vpop.permute.xlu0 %1427
    %1430 = vst [vmem:[#allocation1] ss:$4 sm:$0xff] %v1423
    %v1431 = vld.sshfl [vmem:[#allocation1] sm:$0xff pattern:$0x73625140]
    %v1433 = vld.sshfl [vmem:[#allocation1 + $0x8] sm:$0xff pattern:$0x73625140]
    %v1435 = vld.sshfl [vmem:[#allocation1 + $0x10] sm:$0xff pattern:$0x73625140]
    %1437 = vrot.lane.b32.xlu0 %v1431, 110
    %v1438 = vpop.permute.xlu0 %1437
    %1439 = vrot.lane.b32.xlu0 %v1433, 110
    %v1440 = vpop.permute.xlu0 %1439
    %1441 = vrot.lane.b32.xlu0 %v1435, 110
    %v1442 = vpop.permute.xlu0 %1441
    %v1443 = vsel %vm483, %v1438, %v1440
    %v1444 = vsel %vm483, %v1440, %v1442
    %v1446 = vsel %vm280, %v1428, 0
    %v1449 = vsel %vm32, %v1443, 0
    %v1452 = vsel %vm32, %v1444, 0
    %v1455 = vsel %vm32, %v1442, 0
    %1457 = vmatpush.bf16.msra.mxu0 0
    %1458 = vmatpush.bf16.msra.mxu0 0
    %1459 = vmatpush.bf16.msra.mxu0 0
    %1460 = vmatpush.bf16.msra.mxu0 0
    %1461 = vmatpush.bf16.msra.mxu0 0
    %1462 = vmatpush.bf16.msra.mxu0 0
    %1463 = vmatpush.bf16.msra.mxu0 0
    %1464 = vmatpush.bf16.msra.mxu0 %v1449
    %1465 = vmatmul.bf16.gmra.mxu0 %v1446
    %v1466 = vpop.f32.mrf.mxu0
    %v1467 = vadd.f32 0.0, %v1466
    %v1468 = vpop.f32.mrf.mxu0
    %1469 = vdwg.mxu0
    %1470 = vmatpush.bf16.msra.mxu0 0
    %1471 = vmatpush.bf16.msra.mxu0 0
    %1472 = vmatpush.bf16.msra.mxu0 0
    %1473 = vmatpush.bf16.msra.mxu0 0
    %1474 = vmatpush.bf16.msra.mxu0 0
    %1475 = vmatpush.bf16.msra.mxu0 0
    %1476 = vmatpush.bf16.msra.mxu0 0
    %1477 = vmatpush.bf16.msra.mxu0 %v1452
    %1478 = vmatmul.bf16.gmra.mxu0 %v1446
    %v1479 = vpop.f32.mrf.mxu0
    %v1480 = vadd.f32 0.0, %v1479
    %v1481 = vpop.f32.mrf.mxu0
    %1482 = vdwg.mxu0
    %1483 = vmatpush.bf16.msra.mxu0 0
    %1484 = vmatpush.bf16.msra.mxu0 0
    %1485 = vmatpush.bf16.msra.mxu0 0
    %1486 = vmatpush.bf16.msra.mxu0 0
    %1487 = vmatpush.bf16.msra.mxu0 0
    %1488 = vmatpush.bf16.msra.mxu0 0
    %1489 = vmatpush.bf16.msra.mxu0 0
    %1490 = vmatpush.bf16.msra.mxu0 %v1455
    %1491 = vmatmul.bf16.gmra.mxu0 %v1446
    %v1492 = vpop.f32.mrf.mxu0
    %v1493 = vadd.f32 0.0, %v1492
    %v1494 = vpop.f32.mrf.mxu0
    %1495 = vdwg.mxu0
    %v1496 = vadd.f32 %v1419, %v1467
    %v1497 = vadd.f32 %v1420, %v1480
    %v1498 = vadd.f32 %v1421, %v1493
    %v1499 = vld [vmem:[%s1] sm:$0xf]
    %v1500 = vld [vmem:[#allocation2] sm:$0x3f]
    %v1502 = vunpack.c.l.b16 %v1499
    %v1503 = vpack.c.b16 %v1502, %v1502
    %1504 = vrot.lane.b32.xlu0 %v1503, 112
    %v1505 = vpop.permute.xlu0 %1504
    %1507 = vst [vmem:[#allocation1] ss:$4 sm:$0xff] %v1500
    %v1508 = vld.sshfl [vmem:[#allocation1] sm:$0xff pattern:$0x73625140]
    %v1510 = vld.sshfl [vmem:[#allocation1 + $0x8] sm:$0xff pattern:$0x73625140]
    %v1512 = vld.sshfl [vmem:[#allocation1 + $0x10] sm:$0xff pattern:$0x73625140]
    %1514 = vrot.lane.b32.xlu0 %v1508, 109
    %v1515 = vpop.permute.xlu0 %1514
    %1516 = vrot.lane.b32.xlu0 %v1510, 109
    %v1517 = vpop.permute.xlu0 %1516
    %1518 = vrot.lane.b32.xlu0 %v1512, 109
    %v1519 = vpop.permute.xlu0 %1518
    %v1520 = vsel %vm561, %v1515, %v1517
    %v1521 = vsel %vm561, %v1517, %v1519
    %v1523 = vsel %vm280, %v1505, 0
    %v1526 = vsel %vm32, %v1520, 0
    %v1529 = vsel %vm32, %v1521, 0
    %v1532 = vsel %vm32, %v1519, 0
    %1534 = vmatpush.bf16.msra.mxu0 0
    %1535 = vmatpush.bf16.msra.mxu0 0
    %1536 = vmatpush.bf16.msra.mxu0 0
    %1537 = vmatpush.bf16.msra.mxu0 0
    %1538 = vmatpush.bf16.msra.mxu0 0
    %1539 = vmatpush.bf16.msra.mxu0 0
    %1540 = vmatpush.bf16.msra.mxu0 0
    %1541 = vmatpush.bf16.msra.mxu0 %v1526
    %1542 = vmatmul.bf16.gmra.mxu0 %v1523
    %v1543 = vpop.f32.mrf.mxu0
    %v1544 = vadd.f32 0.0, %v1543
    %v1545 = vpop.f32.mrf.mxu0
    %1546 = vdwg.mxu0
    %1547 = vmatpush.bf16.msra.mxu0 0
    %1548 = vmatpush.bf16.msra.mxu0 0
    %1549 = vmatpush.bf16.msra.mxu0 0
    %1550 = vmatpush.bf16.msra.mxu0 0
    %1551 = vmatpush.bf16.msra.mxu0 0
    %1552 = vmatpush.bf16.msra.mxu0 0
    %1553 = vmatpush.bf16.msra.mxu0 0
    %1554 = vmatpush.bf16.msra.mxu0 %v1529
    %1555 = vmatmul.bf16.gmra.mxu0 %v1523
    %v1556 = vpop.f32.mrf.mxu0
    %v1557 = vadd.f32 0.0, %v1556
    %v1558 = vpop.f32.mrf.mxu0
    %1559 = vdwg.mxu0
    %1560 = vmatpush.bf16.msra.mxu0 0
    %1561 = vmatpush.bf16.msra.mxu0 0
    %1562 = vmatpush.bf16.msra.mxu0 0
    %1563 = vmatpush.bf16.msra.mxu0 0
    %1564 = vmatpush.bf16.msra.mxu0 0
    %1565 = vmatpush.bf16.msra.mxu0 0
    %1566 = vmatpush.bf16.msra.mxu0 0
    %1567 = vmatpush.bf16.msra.mxu0 %v1532
    %1568 = vmatmul.bf16.gmra.mxu0 %v1523
    %v1569 = vpop.f32.mrf.mxu0
    %v1570 = vadd.f32 0.0, %v1569
    %v1571 = vpop.f32.mrf.mxu0
    %1572 = vdwg.mxu0
    %v1573 = vadd.f32 %v1496, %v1544
    %v1574 = vadd.f32 %v1497, %v1557
    %v1575 = vadd.f32 %v1498, %v1570
    %v1576 = vld [vmem:[%s1] sm:$0xf]
    %v1577 = vld [vmem:[#allocation2] sm:$0x3f]
    %v1579 = vunpack.c.l.b16 %v1576
    %v1580 = vpack.c.b16 %v1579, %v1579
    %1581 = vrot.lane.b32.xlu0 %v1580, 108
    %v1582 = vpop.permute.xlu0 %1581
    %1584 = vst [vmem:[#allocation1] ss:$4 sm:$0xff] %v1577
    %v1585 = vld.sshfl [vmem:[#allocation1] sm:$0xff pattern:$0x73625140]
    %v1587 = vld.sshfl [vmem:[#allocation1 + $0x8] sm:$0xff pattern:$0x73625140]
    %v1589 = vld.sshfl [vmem:[#allocation1 + $0x10] sm:$0xff pattern:$0x73625140]
    %1591 = vrot.lane.b32.xlu0 %v1585, 108
    %v1592 = vpop.permute.xlu0 %1591
    %1593 = vrot.lane.b32.xlu0 %v1587, 108
    %v1594 = vpop.permute.xlu0 %1593
    %1595 = vrot.lane.b32.xlu0 %v1589, 108
    %v1596 = vpop.permute.xlu0 %1595
    %v1597 = vsel %vm639, %v1592, %v1594
    %v1598 = vsel %vm639, %v1594, %v1596
    %v1600 = vsel %vm280, %v1582, 0
    %v1603 = vsel %vm32, %v1597, 0
    %v1606 = vsel %vm32, %v1598, 0
    %v1609 = vsel %vm32, %v1596, 0
    %1611 = vmatpush.bf16.msra.mxu0 0
    %1612 = vmatpush.bf16.msra.mxu0 0
    %1613 = vmatpush.bf16.msra.mxu0 0
    %1614 = vmatpush.bf16.msra.mxu0 0
    %1615 = vmatpush.bf16.msra.mxu0 0
    %1616 = vmatpush.bf16.msra.mxu0 0
    %1617 = vmatpush.bf16.msra.mxu0 0
    %1618 = vmatpush.bf16.msra.mxu0 %v1603
    %1619 = vmatmul.bf16.gmra.mxu0 %v1600
    %v1620 = vpop.f32.mrf.mxu0
    %v1621 = vadd.f32 0.0, %v1620
    %v1622 = vpop.f32.mrf.mxu0
    %1623 = vdwg.mxu0
    %1624 = vmatpush.bf16.msra.mxu0 0
    %1625 = vmatpush.bf16.msra.mxu0 0
    %1626 = vmatpush.bf16.msra.mxu0 0
    %1627 = vmatpush.bf16.msra.mxu0 0
    %1628 = vmatpush.bf16.msra.mxu0 0
    %1629 = vmatpush.bf16.msra.mxu0 0
    %1630 = vmatpush.bf16.msra.mxu0 0
    %1631 = vmatpush.bf16.msra.mxu0 %v1606
    %1632 = vmatmul.bf16.gmra.mxu0 %v1600
    %v1633 = vpop.f32.mrf.mxu0
    %v1634 = vadd.f32 0.0, %v1633
    %v1635 = vpop.f32.mrf.mxu0
    %1636 = vdwg.mxu0
    %1637 = vmatpush.bf16.msra.mxu0 0
    %1638 = vmatpush.bf16.msra.mxu0 0
    %1639 = vmatpush.bf16.msra.mxu0 0
    %1640 = vmatpush.bf16.msra.mxu0 0
    %1641 = vmatpush.bf16.msra.mxu0 0
    %1642 = vmatpush.bf16.msra.mxu0 0
    %1643 = vmatpush.bf16.msra.mxu0 0
    %1644 = vmatpush.bf16.msra.mxu0 %v1609
    %1645 = vmatmul.bf16.gmra.mxu0 %v1600
    %v1646 = vpop.f32.mrf.mxu0
    %v1647 = vadd.f32 0.0, %v1646
    %v1648 = vpop.f32.mrf.mxu0
    %1649 = vdwg.mxu0
    %v1650 = vadd.f32 %v1573, %v1621
    %v1651 = vadd.f32 %v1574, %v1634
    %v1652 = vadd.f32 %v1575, %v1647
    %v1653 = vld [vmem:[%s1] sm:$0xf]
    %v1654 = vld [vmem:[#allocation2] sm:$0x3f]
    %v1656 = vunpack.c.l.b16 %v1653
    %v1657 = vpack.c.b16 %v1656, %v1656
    %1658 = vrot.lane.b32.xlu0 %v1657, 104
    %v1659 = vpop.permute.xlu0 %1658
    %1661 = vst [vmem:[#allocation1] ss:$4 sm:$0xff] %v1654
    %v1662 = vld.sshfl [vmem:[#allocation1] sm:$0xff pattern:$0x73625140]
    %v1664 = vld.sshfl [vmem:[#allocation1 + $0x8] sm:$0xff pattern:$0x73625140]
    %v1666 = vld.sshfl [vmem:[#allocation1 + $0x10] sm:$0xff pattern:$0x73625140]
    %1668 = vrot.lane.b32.xlu0 %v1662, 92
    %v1669 = vpop.permute.xlu0 %1668
    %1670 = vrot.lane.b32.xlu0 %v1664, 92
    %v1671 = vpop.permute.xlu0 %1670
    %1672 = vrot.lane.b32.xlu0 %v1666, 92
    %v1673 = vpop.permute.xlu0 %1672
    %v1674 = vsel %vm717, %v1669, %v1671
    %v1675 = vsel %vm717, %v1671, %v1673
    %v1677 = vsel %vm280, %v1659, 0
    %v1680 = vsel %vm32, %v1674, 0
    %v1683 = vsel %vm32, %v1675, 0
    %v1686 = vsel %vm32, %v1673, 0
    %1688 = vmatpush.bf16.msra.mxu0 0
    %1689 = vmatpush.bf16.msra.mxu0 0
    %1690 = vmatpush.bf16.msra.mxu0 0
    %1691 = vmatpush.bf16.msra.mxu0 0
    %1692 = vmatpush.bf16.msra.mxu0 0
    %1693 = vmatpush.bf16.msra.mxu0 0
    %1694 = vmatpush.bf16.msra.mxu0 0
    %1695 = vmatpush.bf16.msra.mxu0 %v1680
    %1696 = vmatmul.bf16.gmra.mxu0 %v1677
    %v1697 = vpop.f32.mrf.mxu0
    %v1698 = vadd.f32 0.0, %v1697
    %v1699 = vpop.f32.mrf.mxu0
    %1700 = vdwg.mxu0
    %1701 = vmatpush.bf16.msra.mxu0 0
    %1702 = vmatpush.bf16.msra.mxu0 0
    %1703 = vmatpush.bf16.msra.mxu0 0
    %1704 = vmatpush.bf16.msra.mxu0 0
    %1705 = vmatpush.bf16.msra.mxu0 0
    %1706 = vmatpush.bf16.msra.mxu0 0
    %1707 = vmatpush.bf16.msra.mxu0 0
    %1708 = vmatpush.bf16.msra.mxu0 %v1683
    %1709 = vmatmul.bf16.gmra.mxu0 %v1677
    %v1710 = vpop.f32.mrf.mxu0
    %v1711 = vadd.f32 0.0, %v1710
    %v1712 = vpop.f32.mrf.mxu0
    %1713 = vdwg.mxu0
    %1714 = vmatpush.bf16.msra.mxu0 0
    %1715 = vmatpush.bf16.msra.mxu0 0
    %1716 = vmatpush.bf16.msra.mxu0 0
    %1717 = vmatpush.bf16.msra.mxu0 0
    %1718 = vmatpush.bf16.msra.mxu0 0
    %1719 = vmatpush.bf16.msra.mxu0 0
    %1720 = vmatpush.bf16.msra.mxu0 0
    %1721 = vmatpush.bf16.msra.mxu0 %v1686
    %1722 = vmatmul.bf16.gmra.mxu0 %v1677
    %v1723 = vpop.f32.mrf.mxu0
    %v1724 = vadd.f32 0.0, %v1723
    %v1725 = vpop.f32.mrf.mxu0
    %1726 = vdwg.mxu0
    %v1727 = vadd.f32 %v1650, %v1698
    %v1728 = vadd.f32 %v1651, %v1711
    %v1729 = vadd.f32 %v1652, %v1724
    %v1730 = vld [vmem:[%s1] sm:$0xf]
    %v1731 = vld [vmem:[#allocation2] sm:$0x3f]
    %v1733 = vunpack.c.l.b16 %v1730
    %v1734 = vpack.c.b16 %v1733, %v1733
    %1735 = vrot.lane.b32.xlu0 %v1734, 100
    %v1736 = vpop.permute.xlu0 %1735
    %1738 = vst [vmem:[#allocation1] ss:$4 sm:$0xff] %v1731
    %v1739 = vld.sshfl [vmem:[#allocation1] sm:$0xff pattern:$0x73625140]
    %v1741 = vld.sshfl [vmem:[#allocation1 + $0x8] sm:$0xff pattern:$0x73625140]
    %v1743 = vld.sshfl [vmem:[#allocation1 + $0x10] sm:$0xff pattern:$0x73625140]
    %1745 = vrot.lane.b32.xlu0 %v1739, 91
    %v1746 = vpop.permute.xlu0 %1745
    %1747 = vrot.lane.b32.xlu0 %v1741, 91
    %v1748 = vpop.permute.xlu0 %1747
    %1749 = vrot.lane.b32.xlu0 %v1743, 91
    %v1750 = vpop.permute.xlu0 %1749
    %v1751 = vsel %vm795, %v1746, %v1748
    %v1752 = vsel %vm795, %v1748, %v1750
    %v1754 = vsel %vm280, %v1736, 0
    %v1757 = vsel %vm32, %v1751, 0
    %v1760 = vsel %vm32, %v1752, 0
    %v1763 = vsel %vm32, %v1750, 0
    %1765 = vmatpush.bf16.msra.mxu0 0
    %1766 = vmatpush.bf16.msra.mxu0 0
    %1767 = vmatpush.bf16.msra.mxu0 0
    %1768 = vmatpush.bf16.msra.mxu0 0
    %1769 = vmatpush.bf16.msra.mxu0 0
    %1770 = vmatpush.bf16.msra.mxu0 0
    %1771 = vmatpush.bf16.msra.mxu0 0
    %1772 = vmatpush.bf16.msra.mxu0 %v1757
    %1773 = vmatmul.bf16.gmra.mxu0 %v1754
    %v1774 = vpop.f32.mrf.mxu0
    %v1775 = vadd.f32 0.0, %v1774
    %v1776 = vpop.f32.mrf.mxu0
    %1777 = vdwg.mxu0
    %1778 = vmatpush.bf16.msra.mxu0 0
    %1779 = vmatpush.bf16.msra.mxu0 0
    %1780 = vmatpush.bf16.msra.mxu0 0
    %1781 = vmatpush.bf16.msra.mxu0 0
    %1782 = vmatpush.bf16.msra.mxu0 0
    %1783 = vmatpush.bf16.msra.mxu0 0
    %1784 = vmatpush.bf16.msra.mxu0 0
    %1785 = vmatpush.bf16.msra.mxu0 %v1760
    %1786 = vmatmul.bf16.gmra.mxu0 %v1754
    %v1787 = vpop.f32.mrf.mxu0
    %v1788 = vadd.f32 0.0, %v1787
    %v1789 = vpop.f32.mrf.mxu0
    %1790 = vdwg.mxu0
    %1791 = vmatpush.bf16.msra.mxu0 0
    %1792 = vmatpush.bf16.msra.mxu0 0
    %1793 = vmatpush.bf16.msra.mxu0 0
    %1794 = vmatpush.bf16.msra.mxu0 0
    %1795 = vmatpush.bf16.msra.mxu0 0
    %1796 = vmatpush.bf16.msra.mxu0 0
    %1797 = vmatpush.bf16.msra.mxu0 0
    %1798 = vmatpush.bf16.msra.mxu0 %v1763
    %1799 = vmatmul.bf16.gmra.mxu0 %v1754
    %v1800 = vpop.f32.mrf.mxu0
    %v1801 = vadd.f32 0.0, %v1800
    %v1802 = vpop.f32.mrf.mxu0
    %1803 = vdwg.mxu0
    %v1804 = vadd.f32 %v1727, %v1775
    %v1805 = vadd.f32 %v1728, %v1788
    %v1806 = vadd.f32 %v1729, %v1801
    %v1807 = vld [vmem:[%s1] sm:$0xf]
    %v1808 = vld [vmem:[#allocation2] sm:$0x3f]
    %v1810 = vunpack.c.l.b16 %v1807
    %v1811 = vpack.c.b16 %v1810, %v1810
    %1812 = vrot.lane.b32.xlu0 %v1811, 96
    %v1813 = vpop.permute.xlu0 %1812
    %1815 = vst [vmem:[#allocation1] ss:$4 sm:$0xff] %v1808
    %v1816 = vld.sshfl [vmem:[#allocation1] sm:$0xff pattern:$0x73625140]
    %v1818 = vld.sshfl [vmem:[#allocation1 + $0x8] sm:$0xff pattern:$0x73625140]
    %v1820 = vld.sshfl [vmem:[#allocation1 + $0x10] sm:$0xff pattern:$0x73625140]
    %1822 = vrot.lane.b32.xlu0 %v1816, 90
    %v1823 = vpop.permute.xlu0 %1822
    %1824 = vrot.lane.b32.xlu0 %v1818, 90
    %v1825 = vpop.permute.xlu0 %1824
    %1826 = vrot.lane.b32.xlu0 %v1820, 90
    %v1827 = vpop.permute.xlu0 %1826
    %v1828 = vsel %vm873, %v1823, %v1825
    %v1829 = vsel %vm873, %v1825, %v1827
    %v1831 = vsel %vm280, %v1813, 0
    %v1834 = vsel %vm32, %v1828, 0
    %v1837 = vsel %vm32, %v1829, 0
    %v1840 = vsel %vm32, %v1827, 0
    %1842 = vmatpush.bf16.msra.mxu0 0
    %1843 = vmatpush.bf16.msra.mxu0 0
    %1844 = vmatpush.bf16.msra.mxu0 0
    %1845 = vmatpush.bf16.msra.mxu0 0
    %1846 = vmatpush.bf16.msra.mxu0 0
    %1847 = vmatpush.bf16.msra.mxu0 0
    %1848 = vmatpush.bf16.msra.mxu0 0
    %1849 = vmatpush.bf16.msra.mxu0 %v1834
    %1850 = vmatmul.bf16.gmra.mxu0 %v1831
    %v1851 = vpop.f32.mrf.mxu0
    %v1852 = vadd.f32 0.0, %v1851
    %v1853 = vpop.f32.mrf.mxu0
    %1854 = vdwg.mxu0
    %1855 = vmatpush.bf16.msra.mxu0 0
    %1856 = vmatpush.bf16.msra.mxu0 0
    %1857 = vmatpush.bf16.msra.mxu0 0
    %1858 = vmatpush.bf16.msra.mxu0 0
    %1859 = vmatpush.bf16.msra.mxu0 0
    %1860 = vmatpush.bf16.msra.mxu0 0
    %1861 = vmatpush.bf16.msra.mxu0 0
    %1862 = vmatpush.bf16.msra.mxu0 %v1837
    %1863 = vmatmul.bf16.gmra.mxu0 %v1831
    %v1864 = vpop.f32.mrf.mxu0
    %v1865 = vadd.f32 0.0, %v1864
    %v1866 = vpop.f32.mrf.mxu0
    %1867 = vdwg.mxu0
    %1868 = vmatpush.bf16.msra.mxu0 0
    %1869 = vmatpush.bf16.msra.mxu0 0
    %1870 = vmatpush.bf16.msra.mxu0 0
    %1871 = vmatpush.bf16.msra.mxu0 0
    %1872 = vmatpush.bf16.msra.mxu0 0
    %1873 = vmatpush.bf16.msra.mxu0 0
    %1874 = vmatpush.bf16.msra.mxu0 0
    %1875 = vmatpush.bf16.msra.mxu0 %v1840
    %1876 = vmatmul.bf16.gmra.mxu0 %v1831
    %v1877 = vpop.f32.mrf.mxu0
    %v1878 = vadd.f32 0.0, %v1877
    %v1879 = vpop.f32.mrf.mxu0
    %1880 = vdwg.mxu0
    %v1881 = vadd.f32 %v1804, %v1852
    %v1882 = vadd.f32 %v1805, %v1865
    %v1883 = vadd.f32 %v1806, %v1878
    %v1884 = vld [vmem:[%s2] sm:$0xff]
    %1886 = vset.pattern.permute.xlu0 0
    %1887 = vperm.xlu0 %1886, %v1884
    %v1888 = vpop.permute.xlu0 %1887
    %v1890 = vadd.f32 %v1881, %v1888
    %v1891 = vadd.f32 %v1882, %v1888
    %v1892 = vadd.f32 %v1883, %v1888
    %v1893 = vmax.f32 %v1890, 0.0
    %v1894 = vmax.f32 %v1891, 0.0
    %v1895 = vmax.f32 %v1892, 0.0
    %s1896 = scalar_lea.vmem [#allocation6], 16
    %1897 = vst.msk [vmem:[%s1896] sm:$0xff] %vm942, %v1893
    %1899 = vrot.lane.b32.xlu0 %v1893, 126
    %v1900 = vpop.permute.xlu0 %1899
    %1902 = vst.msk [vmem:[%s1896] sm:$0xff] %vm948, %v1900
    %1903 = vrot.lane.b32.xlu0 %v1893, 124
    %v1904 = vpop.permute.xlu0 %1903
    %1906 = vst.msk [vmem:[%s1896] sm:$0xff] %vm953, %v1904
    %1907 = vrot.lane.b32.xlu0 %v1893, 122
    %v1908 = vpop.permute.xlu0 %1907
    %1910 = vst.msk [vmem:[%s1896] sm:$0xff] %vm958, %v1908
    %1911 = vrot.lane.b32.xlu0 %v1893, 120
    %v1912 = vpop.permute.xlu0 %1911
    %1914 = vst.msk [vmem:[%s1896] sm:$0xff] %vm963, %v1912
    %1915 = vrot.lane.b32.xlu0 %v1893, 118
    %v1916 = vpop.permute.xlu0 %1915
    %1918 = vst.msk [vmem:[%s1896] sm:$0xff] %vm968, %v1916
    %1919 = vrot.lane.b32.xlu0 %v1893, 116
    %v1920 = vpop.permute.xlu0 %1919
    %1922 = vst.msk [vmem:[%s1896] sm:$0xff] %vm973, %v1920
    %1924 = vrot.lane.b32.xlu0 %v1893, 114
    %v1925 = vpop.permute.xlu0 %1924
    %1926 = vrot.lane.b32.xlu0 %v1894, 114
    %v1927 = vpop.permute.xlu0 %1926
    %v1928 = vsel %vm980, %v1925, %v1927
    %1930 = vst.msk [vmem:[%s1896] sm:$0xff] %vm983, %v1928
    %1931 = vrot.lane.b32.xlu0 %v1894, 112
    %v1932 = vpop.permute.xlu0 %1931
    %1934 = vst.msk [vmem:[%s1896 + $0x8] sm:$0xff] %vm942, %v1932
    %1935 = vrot.lane.b32.xlu0 %v1894, 110
    %v1936 = vpop.permute.xlu0 %1935
    %1938 = vst.msk [vmem:[%s1896 + $0x8] sm:$0xff] %vm948, %v1936
    %1939 = vrot.lane.b32.xlu0 %v1894, 108
    %v1940 = vpop.permute.xlu0 %1939
    %1942 = vst.msk [vmem:[%s1896 + $0x8] sm:$0xff] %vm953, %v1940
    %1943 = vrot.lane.b32.xlu0 %v1894, 106
    %v1944 = vpop.permute.xlu0 %1943
    %1946 = vst.msk [vmem:[%s1896 + $0x8] sm:$0xff] %vm958, %v1944
    %1947 = vrot.lane.b32.xlu0 %v1894, 104
    %v1948 = vpop.permute.xlu0 %1947
    %1950 = vst.msk [vmem:[%s1896 + $0x8] sm:$0xff] %vm963, %v1948
    %1951 = vrot.lane.b32.xlu0 %v1894, 102
    %v1952 = vpop.permute.xlu0 %1951
    %1954 = vst.msk [vmem:[%s1896 + $0x8] sm:$0xff] %vm968, %v1952
    %1956 = vrot.lane.b32.xlu0 %v1894, 100
    %v1957 = vpop.permute.xlu0 %1956
    %1958 = vrot.lane.b32.xlu0 %v1895, 100
    %v1959 = vpop.permute.xlu0 %1958
    %v1960 = vsel %vm1014, %v1957, %v1959
    %1962 = vst.msk [vmem:[%s1896 + $0x8] sm:$0xff] %vm973, %v1960
    %1963 = vrot.lane.b32.xlu0 %v1895, 98
    %v1964 = vpop.permute.xlu0 %1963
    %1966 = vst.msk [vmem:[%s1896 + $0x8] sm:$0xff] %vm983, %v1964
    // Predicated region
    $region18: #{tpu_custom_call.1} parent=1 // pred_check
      _
    $region19: #{tpu_custom_call.1} parent=1 // pred_check_branch
      %1968 = sbr.rel (0) target = $region21
    $region20: #{tpu_custom_call.1} parent=1 // pred_region
      %1970 = vsyncadd [#allocation5], 0
      %s1971 = sshll.u32 [#allocation6], 4
      %s1972 = int_to_ptr.vmem [resolvable:$true] %s1971
      %s1973 = sshll.u32 %s3, 4
      %s1974 = int_to_ptr.hbm [resolvable:$true] %s1973
      %1979 = dma.vmem_to_hbm [thread:$0]  %s1972, 512, %s1974, [#allocation5], 256, 256, 16
    $region21: #{tpu_custom_call.1} parent=1 // pred_fallthru
      _
    // Predicated region
    $region22: #{tpu_custom_call.1} parent=1 // pred_check
      _
    $region23: #{tpu_custom_call.1} parent=1 // pred_check_branch
      %1981 = sbr.rel (0) target = $region25
    $region24: #{tpu_custom_call.1} parent=1 // pred_region
      %1983 = dma.done [#allocation5], 512
    $region25: #{tpu_custom_call.1} parent=1 // pred_fallthru
      _
    %1984 = vsyncpa [#allocation4], 1
    %1985 = vsyncpa [#allocation5], 1

</llo_original>
